<compile_context>
chip_gen: v6e
topology: v6e:2x2x1
jax: 0.10.0
libtpu: 0.0.40
codegen_flags: <defaults>
</compile_context>

<pallas_src>
import math

import jax
import jax.numpy as jnp
from jax import lax
from jax.experimental import pallas as pl
from jax.experimental.pallas import tpu as pltpu


def _round_up(x, m):
    return (x + m - 1) // m * m


# ---------------------------------------------------------------------------
# Fused kernel: all RNN layers (recurrence, j==0 only) + vocab-tiled output GEMM
# ---------------------------------------------------------------------------

def _make_fused_kernel(num_layers, seq, b8, matmul_dtype):
    md = matmul_dtype

    def kernel(*refs):
        x_ref = refs[0]                           # (seq*b8, E_pad) f32
        h0_ref = refs[1]                          # (L, b8, H_pad) f32
        w_refs = refs[2:2 + 3 * num_layers]       # per layer: W_ih^T, W_hh^T, b
        wout_ref = refs[2 + 3 * num_layers]       # (H_pad, TN)  (vocab tile)
        bout_ref = refs[3 + 3 * num_layers]       # (1, TN)
        out_ref = refs[4 + 3 * num_layers]        # (seq*b8, TN) f32
        hT_ref = refs[5 + 3 * num_layers]         # (L, b8, H_pad) f32
        act_scr = refs[6 + 3 * num_layers]        # VMEM (seq*b8, H_pad) f32
        xproj_scr = refs[7 + 3 * num_layers]      # VMEM (seq*b8, H_pad) f32

        # --- recurrence: only on the first vocab tile; result persists in VMEM.
        @pl.when(pl.program_id(0) == 0)
        def _recurrence():
            for l in range(num_layers):
                wih_t = w_refs[3 * l][...]        # (in_pad, H_pad), matmul dtype
                whh_t = w_refs[3 * l + 1][...]    # (H_pad, H_pad), matmul dtype
                b = w_refs[3 * l + 2][...]        # (1, H_pad) f32 (b_ih + b_hh)

                layer_in = (x_ref if l == 0 else act_scr)[...]
                # Hoisted input projection + combined bias: one big (seq*b8)-row
                # matmul per layer; stored in VMEM, loaded per step.
                xproj_scr[...] = (
                    jnp.dot(layer_in.astype(md), wih_t,
                            preferred_element_type=jnp.float32) + b)

                h0 = h0_ref[l].astype(jnp.float32)      # (b8, H_pad)

                def step(t, h):
                    row = pl.multiple_of(t * b8, b8)    # (8,128)-aligned slice
                    pre = xproj_scr[pl.ds(row, b8), :] + jnp.dot(
                        h.astype(md), whh_t, preferred_element_type=jnp.float32)
                    h_new = jnp.tanh(pre)               # f32 carry / tanh
                    act_scr[pl.ds(row, b8), :] = h_new  # whole-tile store
                    return h_new

                h_final = lax.fori_loop(0, seq, step, h0, unroll=True)
                hT_ref[l] = h_final.astype(hT_ref.dtype)
                # Inter-layer dropout: identity (eval mode).

        # --- output linear, one lane-dense vocab tile per grid step.
        acts = act_scr[...]
        out_ref[...] = (
            jnp.dot(acts.astype(md), wout_ref[...],
                    preferred_element_type=jnp.float32)
            + bout_ref[...]).astype(out_ref.dtype)

    return kernel


# ---------------------------------------------------------------------------
# One-time parameter packing: transpose, pad to (8,128) multiples, combine bias
# ---------------------------------------------------------------------------

def pack_params(params, matmul_dtype=jnp.bfloat16):
    f32 = jnp.float32
    E = params["embedding"].shape[1]
    H = params["w_hh"][0].shape[0]
    V = params["w_out"].shape[0]
    L = len(params["w_ih"])
    E_pad, H_pad, V_pad = _round_up(E, 128), _round_up(H, 128), _round_up(V, 128)

    emb_p = jnp.zeros((V, E_pad), f32).at[:, :E].set(params["embedding"])

    layers = []
    for l in range(L):
        in_dim = E if l == 0 else H
        in_pad = E_pad if l == 0 else H_pad
        wih_t = jnp.zeros((in_pad, H_pad), matmul_dtype).at[:in_dim, :H].set(
            params["w_ih"][l].T.astype(matmul_dtype))
        whh_t = jnp.zeros((H_pad, H_pad), matmul_dtype).at[:H, :H].set(
            params["w_hh"][l].T.astype(matmul_dtype))
        b = jnp.zeros((1, H_pad), f32).at[0, :H].set(
            params["b_ih"][l] + params["b_hh"][l])
        layers.append((wih_t, whh_t, b))

    wout_t = jnp.zeros((H_pad, V_pad), matmul_dtype).at[:H, :V].set(
        params["w_out"].T.astype(matmul_dtype))
    bout = jnp.zeros((1, V_pad), f32).at[0, :V].set(params["b_out"])

    return {
        "embedding": emb_p, "layers": layers, "wout_t": wout_t, "bout": bout,
        "num_layers": L, "E": E, "E_pad": E_pad, "H": H, "H_pad": H_pad,
        "V": V, "V_pad": V_pad, "matmul_dtype": matmul_dtype,
    }


# ---------------------------------------------------------------------------
# Wrapper (mirrors SimpleRNN.forward for rec_layer='RNN', nonlinearity='tanh')
# ---------------------------------------------------------------------------

def _nbytes(shape, dtype):
    return math.prod(shape) * jnp.dtype(dtype).itemsize


def simple_rnn_forward(input_x, hidden, packed):
    """input_x: (seq, batch) int32; hidden: (L, batch, H) f32.
    Returns (logits (seq*batch, num_tokens) f32, new_hidden (L, batch, H) f32)."""
    seq, batch = input_x.shape
    L = packed["num_layers"]
    H, H_pad = packed["H"], packed["H_pad"]
    V, V_pad = packed["V"], packed["V_pad"]
    E_pad = packed["E_pad"]
    md = packed["matmul_dtype"]
    B8 = _round_up(batch, 8)

    # Vocab tile (lane-dense, multiple of 128, divides V_pad).
    if V_pad % 512 == 0:
        TN = 512
    elif V_pad % 256 == 0:
        TN = 256
    else:
        TN = 128
    TN = min(TN, V_pad)
    n_vtiles = V_pad // TN

    # Embedding gather in plain JAX glue (padded rows use token 0; they only
    # ever produce padded batch rows, which are discarded).
    ids = jnp.pad(input_x, ((0, 0), (0, B8 - batch)))
    x2d = packed["embedding"][ids].reshape(seq * B8, E_pad)
    h_pad = jnp.pad(hidden, ((0, 0), (0, B8 - batch), (0, H_pad - H)))

    flat_inputs = [x2d, h_pad]
    in_specs = [
        pl.BlockSpec((seq * B8, E_pad), lambda j: (0, 0)),
        pl.BlockSpec((L, B8, H_pad), lambda j: (0, 0, 0)),
    ]
    for l in range(L):
        wih_t, whh_t, b = packed["layers"][l]
        in_pad = E_pad if l == 0 else H_pad
        flat_inputs += [wih_t, whh_t, b]
        in_specs += [
            pl.BlockSpec((in_pad, H_pad), lambda j: (0, 0)),
            pl.BlockSpec((H_pad, H_pad), lambda j: (0, 0)),
            pl.BlockSpec((1, H_pad), lambda j: (0, 0)),
        ]
    flat_inputs += [packed["wout_t"], packed["bout"]]
    in_specs += [
        pl.BlockSpec((H_pad, TN), lambda j: (0, j)),
        pl.BlockSpec((1, TN), lambda j: (0, j)),
    ]

    # Explicit VMEM budget (2x for BlockSpec double-buffering) + slack.
    budget = 2 * _nbytes((seq * B8, E_pad), jnp.float32)
    budget += 2 * 2 * _nbytes((L, B8, H_pad), jnp.float32)          # h0 + hT
    for l in range(L):
        in_pad = E_pad if l == 0 else H_pad
        budget += 2 * (_nbytes((in_pad, H_pad), md) + _nbytes((H_pad, H_pad), md)
                       + _nbytes((1, H_pad), jnp.float32))
    budget += 2 * (_nbytes((H_pad, TN), md) + _nbytes((1, TN), jnp.float32))
    budget += 2 * _nbytes((seq * B8, TN), jnp.float32)              # out tile
    budget += 2 * _nbytes((seq * B8, H_pad), jnp.float32)           # scratches
    vmem_limit = int(min(48 * 2**20, max(4 * 2**20, 2 * budget)))

    kernel = _make_fused_kernel(L, seq, B8, md)
    logits_pad, hT_pad = pl.pallas_call(
        kernel,
        out_shape=(
            jax.ShapeDtypeStruct((seq * B8, V_pad), jnp.float32),   # pinned f32
            jax.ShapeDtypeStruct((L, B8, H_pad), jnp.float32),
        ),
        grid=(n_vtiles,),
        in_specs=in_specs,
        out_specs=(
            pl.BlockSpec((seq * B8, TN), lambda j: (0, j)),
            pl.BlockSpec((L, B8, H_pad), lambda j: (0, 0, 0)),
        ),
        scratch_shapes=[
            pltpu.VMEM((seq * B8, H_pad), jnp.float32),   # activations
            pltpu.VMEM((seq * B8, H_pad), jnp.float32),   # hoisted input proj
        ],
        input_output_aliases={1: 1},                      # hidden -> new_hidden
        compiler_params=pltpu.CompilerParams(
            dimension_semantics=("arbitrary",),           # recurrence on tile 0
            vmem_limit_bytes=vmem_limit),
    )(*flat_inputs)

    logits = logits_pad.reshape(seq, B8, V_pad)[:, :batch, :V].reshape(
        seq * batch, V)
    new_hidden = hT_pad[:, :batch, :H]
    return logits, new_hidden


# ---------------------------------------------------------------------------
# Deterministic parameter init (shapes from SimpleRNN.__init__ / init_weights)
# ---------------------------------------------------------------------------

def init_params(key, num_tokens, embedding_dim, hidden_dim, num_layers):
    initrange = 0.1
    stdv = 1.0 / jnp.sqrt(jnp.float32(hidden_dim))
    keys = jax.random.split(key, 2 + 4 * num_layers)
    params = {
        "embedding": jax.random.uniform(keys[0], (num_tokens, embedding_dim),
                                        jnp.float32, -initrange, initrange),
        "w_out": jax.random.uniform(keys[1], (num_tokens, hidden_dim),
                                    jnp.float32, -initrange, initrange),
        "b_out": jnp.zeros((num_tokens,), jnp.float32),
        "w_ih": [], "w_hh": [], "b_ih": [], "b_hh": [],
    }
    for l in range(num_layers):
        in_dim = embedding_dim if l == 0 else hidden_dim
        k = keys[2 + 4 * l: 2 + 4 * (l + 1)]
        params["w_ih"].append(jax.random.uniform(k[0], (hidden_dim, in_dim),
                                                 jnp.float32, -stdv, stdv))
        params["w_hh"].append(jax.random.uniform(k[1], (hidden_dim, hidden_dim),
                                                 jnp.float32, -stdv, stdv))
        params["b_ih"].append(jax.random.uniform(k[2], (hidden_dim,),
                                                 jnp.float32, -stdv, stdv))
        params["b_hh"].append(jax.random.uniform(k[3], (hidden_dim,),
                                                 jnp.float32, -stdv, stdv))
    return params


# ---------------------------------------------------------------------------
# Pure-JAX reference (for correctness check)
# ---------------------------------------------------------------------------

def reference_forward(input_x, hidden, params):
    x = params["embedding"][input_x]
    hs = []
    for l in range(len(params["w_ih"])):
        h = hidden[l]
        outs = []
        for t in range(x.shape[0]):
            h = jnp.tanh(x[t] @ params["w_ih"][l].T + h @ params["w_hh"][l].T
                         + params["b_ih"][l] + params["b_hh"][l])
            outs.append(h)
        x = jnp.stack(outs)
        hs.append(h)
    seq, batch, hidden_dim = x.shape
    out = x.reshape(seq * batch, hidden_dim) @ params["w_out"].T + params["b_out"]
    return out, jnp.stack(hs)


# ---------------------------------------------------------------------------

if __name__ == "__main__":
    num_tokens, embedding_dim, hidden_dim, num_layers = 32, 16, 32, 2
    seq_len, batch = 8, 4

    key = jax.random.PRNGKey(0)
    k_params, k_tokens = jax.random.split(key)
    params = init_params(k_params, num_tokens, embedding_dim, hidden_dim,
                         num_layers)

    input_x = jax.random.randint(k_tokens, (seq_len, batch), 0, num_tokens,
                                 dtype=jnp.int32)
    hidden0 = jnp.zeros((num_layers, batch, hidden_dim), jnp.float32)

    ref_out, ref_hidden = reference_forward(input_x, hidden0, params)

    # f32 MXU path: tight numerical check of the kernel structure.
    packed_f32 = pack_params(params, matmul_dtype=jnp.float32)
    out, new_hidden = simple_rnn_forward(input_x, hidden0, packed_f32)
    out, new_hidden = jax.block_until_ready((out, new_hidden))
    assert out.shape == (seq_len * batch, num_tokens)
    assert new_hidden.shape == (num_layers, batch, hidden_dim)
    assert jnp.allclose(out, ref_out, atol=1e-5, rtol=1e-5)
    assert jnp.allclose(new_hidden, ref_hidden, atol=1e-5, rtol=1e-5)

    # bf16 MXU operands (f32 accumulation) — the default perf configuration;
    # loose tolerance vs. the f32 reference (bf16 weight/activation rounding).
    packed_bf16 = pack_params(params, matmul_dtype=jnp.bfloat16)
    out_bf, hid_bf = simple_rnn_forward(input_x, hidden0, packed_bf16)
    out_bf, hid_bf = jax.block_until_ready((out_bf, hid_bf))
    assert jnp.allclose(out_bf, ref_out, atol=1e-1, rtol=1e-1)
    assert jnp.allclose(hid_bf, ref_hidden, atol=1e-1, rtol=1e-1)

    print("KERNEL_OK")
</pallas_src>

<mosaic_0001>
module attributes {stable_mosaic.version = 11 : i64} {
  func.func @kernel(%arg0: i32, %arg1: memref<64x128xf32, #tpu.memory_space<vmem>>, %arg2: memref<2x8x128xf32, #tpu.memory_space<vmem>>, %arg3: memref<128x128xf32, #tpu.memory_space<vmem>>, %arg4: memref<128x128xf32, #tpu.memory_space<vmem>>, %arg5: memref<1x128xf32, #tpu.memory_space<vmem>>, %arg6: memref<128x128xf32, #tpu.memory_space<vmem>>, %arg7: memref<128x128xf32, #tpu.memory_space<vmem>>, %arg8: memref<1x128xf32, #tpu.memory_space<vmem>>, %arg9: memref<128x128xf32, #tpu.memory_space<vmem>>, %arg10: memref<1x128xf32, #tpu.memory_space<vmem>>, %arg11: memref<64x128xf32, #tpu.memory_space<vmem>>, %arg12: memref<2x8x128xf32, #tpu.memory_space<vmem>>, %arg13: memref<64x128xf32, #tpu.memory_space<vmem>>, %arg14: memref<64x128xf32, #tpu.memory_space<vmem>>) attributes {dimension_semantics = [#tpu.dimension_semantics<arbitrary>], iteration_bounds = array<i64: 1>, scalar_prefetch = 0 : i64, scratch_operands = 2 : i64, tpu.core_type = #tpu.core_type<tc>, window_params = [{pipeline_mode = #tpu.pipeline_mode<synchronous>, transform_indices = @transform_0, window_bounds = array<i64: 64, 128>}, {pipeline_mode = #tpu.pipeline_mode<synchronous>, transform_indices = @transform_1, window_bounds = array<i64: 2, 8, 128>}, {pipeline_mode = #tpu.pipeline_mode<synchronous>, transform_indices = @transform_2, window_bounds = array<i64: 128, 128>}, {pipeline_mode = #tpu.pipeline_mode<synchronous>, transform_indices = @transform_3, window_bounds = array<i64: 128, 128>}, {pipeline_mode = #tpu.pipeline_mode<synchronous>, transform_indices = @transform_4, window_bounds = array<i64: 1, 128>}, {pipeline_mode = #tpu.pipeline_mode<synchronous>, transform_indices = @transform_5, window_bounds = array<i64: 128, 128>}, {pipeline_mode = #tpu.pipeline_mode<synchronous>, transform_indices = @transform_6, window_bounds = array<i64: 128, 128>}, {pipeline_mode = #tpu.pipeline_mode<synchronous>, transform_indices = @transform_7, window_bounds = array<i64: 1, 128>}, {transform_indices = @transform_8, window_bounds = array<i64: 128, 128>}, {transform_indices = @transform_9, window_bounds = array<i64: 1, 128>}, {transform_indices = @transform_10, window_bounds = array<i64: 64, 128>}, {pipeline_mode = #tpu.pipeline_mode<synchronous>, transform_indices = @transform_11, window_bounds = array<i64: 2, 8, 128>}]} {
    %c0_i32 = arith.constant 0 : i32
    %0 = arith.cmpi eq, %arg0, %c0_i32 : i32
    %1 = arith.extui %0 : i1 to i32
    %c0_i32_0 = arith.constant 0 : i32
    %2 = arith.cmpi ne, %1, %c0_i32_0 : i32
    scf.if %2 {
      %c0_8 = arith.constant 0 : index
      %c0_9 = arith.constant 0 : index
      %10 = vector.load %arg3[%c0_8, %c0_9] : memref<128x128xf32, #tpu.memory_space<vmem>>, vector<128x128xf32>
      %c0_10 = arith.constant 0 : index
      %c0_11 = arith.constant 0 : index
      %11 = vector.load %arg4[%c0_10, %c0_11] : memref<128x128xf32, #tpu.memory_space<vmem>>, vector<128x128xf32>
      %c0_12 = arith.constant 0 : index
      %c0_13 = arith.constant 0 : index
      %12 = vector.load %arg5[%c0_12, %c0_13] : memref<1x128xf32, #tpu.memory_space<vmem>>, vector<1x128xf32>
      %c0_14 = arith.constant 0 : index
      %c0_15 = arith.constant 0 : index
      %13 = vector.load %arg1[%c0_14, %c0_15] : memref<64x128xf32, #tpu.memory_space<vmem>>, vector<64x128xf32>
      %cst_16 = arith.constant dense<0.000000e+00> : vector<64x128xf32>
      %14 = tpu.matmul %13, %10, %cst_16 {dimension_numbers = #tpu.dot_dimension_numbers<[1], [0], [0], [1], [0, 0, 1, 1], [], []>} : vector<64x128xf32>, vector<128x128xf32>, vector<64x128xf32> -> vector<64x128xf32>
      %15 = vector.broadcast %12 : vector<1x128xf32> to vector<64x128xf32>
      %16 = arith.addf %14, %15 : vector<64x128xf32>
      %c0_17 = arith.constant 0 : index
      %c0_18 = arith.constant 0 : index
      %17 = vector.load %arg14[%c0_17, %c0_18] : memref<64x128xf32, #tpu.memory_space<vmem>>, vector<64x128xf32>
      tpu.vector_store %arg14[%c0_17, %c0_18], %16 {strides = array<i32>} : memref<64x128xf32, #tpu.memory_space<vmem>>, vector<64x128xf32>,
      %c0_19 = arith.constant 0 : index
      %c0_20 = arith.constant 0 : index
      %c0_21 = arith.constant 0 : index
      %18 = vector.load %arg2[%c0_19, %c0_20, %c0_21] : memref<2x8x128xf32, #tpu.memory_space<vmem>>, vector<1x8x128xf32>
      %19 = vector.shape_cast %18 : vector<1x8x128xf32> to vector<8x128xf32>
      %c0_i32_22 = arith.constant 0 : i32
      %c8_i32 = arith.constant 8 : i32
      %20 = arith.muli %c0_i32_22, %c8_i32 : i32
      %21 = tpu.assume_multiple %20, 8 : i32
      %22 = arith.index_cast %21 : i32 to index
      %c0_23 = arith.constant 0 : index
      %23 = vector.load %arg14[%22, %c0_23] : memref<64x128xf32, #tpu.memory_space<vmem>>, vector<8x128xf32>
      %cst_24 = arith.constant dense<0.000000e+00> : vector<8x128xf32>
      %24 = tpu.matmul %19, %11, %cst_24 {dimension_numbers = #tpu.dot_dimension_numbers<[1], [0], [0], [1], [0, 0, 1, 1], [], []>} : vector<8x128xf32>, vector<128x128xf32>, vector<8x128xf32> -> vector<8x128xf32>
      %25 = arith.addf %23, %24 : vector<8x128xf32>
      %26 = math.tanh %25 : vector<8x128xf32>
      %27 = arith.index_cast %21 : i32 to index
      %c0_25 = arith.constant 0 : index
      %28 = vector.load %arg13[%27, %c0_25] : memref<64x128xf32, #tpu.memory_space<vmem>>, vector<8x128xf32>
      tpu.vector_store %arg13[%27, %c0_25], %26 {strides = array<i32>} : memref<64x128xf32, #tpu.memory_space<vmem>>, vector<8x128xf32>,
      %c1_i32 = arith.constant 1 : i32
      %c8_i32_26 = arith.constant 8 : i32
      %29 = arith.muli %c1_i32, %c8_i32_26 : i32
      %30 = tpu.assume_multiple %29, 8 : i32
      %31 = arith.index_cast %30 : i32 to index
      %c0_27 = arith.constant 0 : index
      %32 = vector.load %arg14[%31, %c0_27] : memref<64x128xf32, #tpu.memory_space<vmem>>, vector<8x128xf32>
      %cst_28 = arith.constant dense<0.000000e+00> : vector<8x128xf32>
      %33 = tpu.matmul %26, %11, %cst_28 {dimension_numbers = #tpu.dot_dimension_numbers<[1], [0], [0], [1], [0, 0, 1, 1], [], []>} : vector<8x128xf32>, vector<128x128xf32>, vector<8x128xf32> -> vector<8x128xf32>
      %34 = arith.addf %32, %33 : vector<8x128xf32>
      %35 = math.tanh %34 : vector<8x128xf32>
      %36 = arith.index_cast %30 : i32 to index
      %c0_29 = arith.constant 0 : index
      %37 = vector.load %arg13[%36, %c0_29] : memref<64x128xf32, #tpu.memory_space<vmem>>, vector<8x128xf32>
      tpu.vector_store %arg13[%36, %c0_29], %35 {strides = array<i32>} : memref<64x128xf32, #tpu.memory_space<vmem>>, vector<8x128xf32>,
      %c2_i32 = arith.constant 2 : i32
      %c8_i32_30 = arith.constant 8 : i32
      %38 = arith.muli %c2_i32, %c8_i32_30 : i32
      %39 = tpu.assume_multiple %38, 8 : i32
      %40 = arith.index_cast %39 : i32 to index
      %c0_31 = arith.constant 0 : index
      %41 = vector.load %arg14[%40, %c0_31] : memref<64x128xf32, #tpu.memory_space<vmem>>, vector<8x128xf32>
      %cst_32 = arith.constant dense<0.000000e+00> : vector<8x128xf32>
      %42 = tpu.matmul %35, %11, %cst_32 {dimension_numbers = #tpu.dot_dimension_numbers<[1], [0], [0], [1], [0, 0, 1, 1], [], []>} : vector<8x128xf32>, vector<128x128xf32>, vector<8x128xf32> -> vector<8x128xf32>
      %43 = arith.addf %41, %42 : vector<8x128xf32>
      %44 = math.tanh %43 : vector<8x128xf32>
      %45 = arith.index_cast %39 : i32 to index
      %c0_33 = arith.constant 0 : index
      %46 = vector.load %arg13[%45, %c0_33] : memref<64x128xf32, #tpu.memory_space<vmem>>, vector<8x128xf32>
      tpu.vector_store %arg13[%45, %c0_33], %44 {strides = array<i32>} : memref<64x128xf32, #tpu.memory_space<vmem>>, vector<8x128xf32>,
      %c3_i32 = arith.constant 3 : i32
      %c8_i32_34 = arith.constant 8 : i32
      %47 = arith.muli %c3_i32, %c8_i32_34 : i32
      %48 = tpu.assume_multiple %47, 8 : i32
      %49 = arith.index_cast %48 : i32 to index
      %c0_35 = arith.constant 0 : index
      %50 = vector.load %arg14[%49, %c0_35] : memref<64x128xf32, #tpu.memory_space<vmem>>, vector<8x128xf32>
      %cst_36 = arith.constant dense<0.000000e+00> : vector<8x128xf32>
      %51 = tpu.matmul %44, %11, %cst_36 {dimension_numbers = #tpu.dot_dimension_numbers<[1], [0], [0], [1], [0, 0, 1, 1], [], []>} : vector<8x128xf32>, vector<128x128xf32>, vector<8x128xf32> -> vector<8x128xf32>
      %52 = arith.addf %50, %51 : vector<8x128xf32>
      %53 = math.tanh %52 : vector<8x128xf32>
      %54 = arith.index_cast %48 : i32 to index
      %c0_37 = arith.constant 0 : index
      %55 = vector.load %arg13[%54, %c0_37] : memref<64x128xf32, #tpu.memory_space<vmem>>, vector<8x128xf32>
      tpu.vector_store %arg13[%54, %c0_37], %53 {strides = array<i32>} : memref<64x128xf32, #tpu.memory_space<vmem>>, vector<8x128xf32>,
      %c4_i32 = arith.constant 4 : i32
      %c8_i32_38 = arith.constant 8 : i32
      %56 = arith.muli %c4_i32, %c8_i32_38 : i32
      %57 = tpu.assume_multiple %56, 8 : i32
      %58 = arith.index_cast %57 : i32 to index
      %c0_39 = arith.constant 0 : index
      %59 = vector.load %arg14[%58, %c0_39] : memref<64x128xf32, #tpu.memory_space<vmem>>, vector<8x128xf32>
      %cst_40 = arith.constant dense<0.000000e+00> : vector<8x128xf32>
      %60 = tpu.matmul %53, %11, %cst_40 {dimension_numbers = #tpu.dot_dimension_numbers<[1], [0], [0], [1], [0, 0, 1, 1], [], []>} : vector<8x128xf32>, vector<128x128xf32>, vector<8x128xf32> -> vector<8x128xf32>
      %61 = arith.addf %59, %60 : vector<8x128xf32>
      %62 = math.tanh %61 : vector<8x128xf32>
      %63 = arith.index_cast %57 : i32 to index
      %c0_41 = arith.constant 0 : index
      %64 = vector.load %arg13[%63, %c0_41] : memref<64x128xf32, #tpu.memory_space<vmem>>, vector<8x128xf32>
      tpu.vector_store %arg13[%63, %c0_41], %62 {strides = array<i32>} : memref<64x128xf32, #tpu.memory_space<vmem>>, vector<8x128xf32>,
      %c5_i32 = arith.constant 5 : i32
      %c8_i32_42 = arith.constant 8 : i32
      %65 = arith.muli %c5_i32, %c8_i32_42 : i32
      %66 = tpu.assume_multiple %65, 8 : i32
      %67 = arith.index_cast %66 : i32 to index
      %c0_43 = arith.constant 0 : index
      %68 = vector.load %arg14[%67, %c0_43] : memref<64x128xf32, #tpu.memory_space<vmem>>, vector<8x128xf32>
      %cst_44 = arith.constant dense<0.000000e+00> : vector<8x128xf32>
      %69 = tpu.matmul %62, %11, %cst_44 {dimension_numbers = #tpu.dot_dimension_numbers<[1], [0], [0], [1], [0, 0, 1, 1], [], []>} : vector<8x128xf32>, vector<128x128xf32>, vector<8x128xf32> -> vector<8x128xf32>
      %70 = arith.addf %68, %69 : vector<8x128xf32>
      %71 = math.tanh %70 : vector<8x128xf32>
      %72 = arith.index_cast %66 : i32 to index
      %c0_45 = arith.constant 0 : index
      %73 = vector.load %arg13[%72, %c0_45] : memref<64x128xf32, #tpu.memory_space<vmem>>, vector<8x128xf32>
      tpu.vector_store %arg13[%72, %c0_45], %71 {strides = array<i32>} : memref<64x128xf32, #tpu.memory_space<vmem>>, vector<8x128xf32>,
      %c6_i32 = arith.constant 6 : i32
      %c8_i32_46 = arith.constant 8 : i32
      %74 = arith.muli %c6_i32, %c8_i32_46 : i32
      %75 = tpu.assume_multiple %74, 8 : i32
      %76 = arith.index_cast %75 : i32 to index
      %c0_47 = arith.constant 0 : index
      %77 = vector.load %arg14[%76, %c0_47] : memref<64x128xf32, #tpu.memory_space<vmem>>, vector<8x128xf32>
      %cst_48 = arith.constant dense<0.000000e+00> : vector<8x128xf32>
      %78 = tpu.matmul %71, %11, %cst_48 {dimension_numbers = #tpu.dot_dimension_numbers<[1], [0], [0], [1], [0, 0, 1, 1], [], []>} : vector<8x128xf32>, vector<128x128xf32>, vector<8x128xf32> -> vector<8x128xf32>
      %79 = arith.addf %77, %78 : vector<8x128xf32>
      %80 = math.tanh %79 : vector<8x128xf32>
      %81 = arith.index_cast %75 : i32 to index
      %c0_49 = arith.constant 0 : index
      %82 = vector.load %arg13[%81, %c0_49] : memref<64x128xf32, #tpu.memory_space<vmem>>, vector<8x128xf32>
      tpu.vector_store %arg13[%81, %c0_49], %80 {strides = array<i32>} : memref<64x128xf32, #tpu.memory_space<vmem>>, vector<8x128xf32>,
      %c7_i32 = arith.constant 7 : i32
      %c8_i32_50 = arith.constant 8 : i32
      %83 = arith.muli %c7_i32, %c8_i32_50 : i32
      %84 = tpu.assume_multiple %83, 8 : i32
      %85 = arith.index_cast %84 : i32 to index
      %c0_51 = arith.constant 0 : index
      %86 = vector.load %arg14[%85, %c0_51] : memref<64x128xf32, #tpu.memory_space<vmem>>, vector<8x128xf32>
      %cst_52 = arith.constant dense<0.000000e+00> : vector<8x128xf32>
      %87 = tpu.matmul %80, %11, %cst_52 {dimension_numbers = #tpu.dot_dimension_numbers<[1], [0], [0], [1], [0, 0, 1, 1], [], []>} : vector<8x128xf32>, vector<128x128xf32>, vector<8x128xf32> -> vector<8x128xf32>
      %88 = arith.addf %86, %87 : vector<8x128xf32>
      %89 = math.tanh %88 : vector<8x128xf32>
      %90 = arith.index_cast %84 : i32 to index
      %c0_53 = arith.constant 0 : index
      %91 = vector.load %arg13[%90, %c0_53] : memref<64x128xf32, #tpu.memory_space<vmem>>, vector<8x128xf32>
      tpu.vector_store %arg13[%90, %c0_53], %89 {strides = array<i32>} : memref<64x128xf32, #tpu.memory_space<vmem>>, vector<8x128xf32>,
      %c8_i32_54 = arith.constant 8 : i32
      %c0_55 = arith.constant 0 : index
      %c0_56 = arith.constant 0 : index
      %c0_57 = arith.constant 0 : index
      %92 = vector.load %arg12[%c0_55, %c0_56, %c0_57] : memref<2x8x128xf32, #tpu.memory_space<vmem>>, vector<1x8x128xf32>
      %93 = vector.shape_cast %92 : vector<1x8x128xf32> to vector<8x128xf32>
      %94 = vector.shape_cast %89 : vector<8x128xf32> to vector<1x8x128xf32>
      tpu.vector_store %arg12[%c0_55, %c0_56, %c0_57], %94 {strides = array<i32>} : memref<2x8x128xf32, #tpu.memory_space<vmem>>, vector<1x8x128xf32>,
      %c0_58 = arith.constant 0 : index
      %c0_59 = arith.constant 0 : index
      %95 = vector.load %arg6[%c0_58, %c0_59] : memref<128x128xf32, #tpu.memory_space<vmem>>, vector<128x128xf32>
      %c0_60 = arith.constant 0 : index
      %c0_61 = arith.constant 0 : index
      %96 = vector.load %arg7[%c0_60, %c0_61] : memref<128x128xf32, #tpu.memory_space<vmem>>, vector<128x128xf32>
      %c0_62 = arith.constant 0 : index
      %c0_63 = arith.constant 0 : index
      %97 = vector.load %arg8[%c0_62, %c0_63] : memref<1x128xf32, #tpu.memory_space<vmem>>, vector<1x128xf32>
      %c0_64 = arith.constant 0 : index
      %c0_65 = arith.constant 0 : index
      %98 = vector.load %arg13[%c0_64, %c0_65] : memref<64x128xf32, #tpu.memory_space<vmem>>, vector<64x128xf32>
      %cst_66 = arith.constant dense<0.000000e+00> : vector<64x128xf32>
      %99 = tpu.matmul %98, %95, %cst_66 {dimension_numbers = #tpu.dot_dimension_numbers<[1], [0], [0], [1], [0, 0, 1, 1], [], []>} : vector<64x128xf32>, vector<128x128xf32>, vector<64x128xf32> -> vector<64x128xf32>
      %100 = vector.broadcast %97 : vector<1x128xf32> to vector<64x128xf32>
      %101 = arith.addf %99, %100 : vector<64x128xf32>
      %c0_67 = arith.constant 0 : index
      %c0_68 = arith.constant 0 : index
      %102 = vector.load %arg14[%c0_67, %c0_68] : memref<64x128xf32, #tpu.memory_space<vmem>>, vector<64x128xf32>
      tpu.vector_store %arg14[%c0_67, %c0_68], %101 {strides = array<i32>} : memref<64x128xf32, #tpu.memory_space<vmem>>, vector<64x128xf32>,
      %c1 = arith.constant 1 : index
      %c0_69 = arith.constant 0 : index
      %c0_70 = arith.constant 0 : index
      %103 = vector.load %arg2[%c1, %c0_69, %c0_70] : memref<2x8x128xf32, #tpu.memory_space<vmem>>, vector<1x8x128xf32>
      %104 = vector.shape_cast %103 : vector<1x8x128xf32> to vector<8x128xf32>
      %c0_i32_71 = arith.constant 0 : i32
      %c8_i32_72 = arith.constant 8 : i32
      %105 = arith.muli %c0_i32_71, %c8_i32_72 : i32
      %106 = tpu.assume_multiple %105, 8 : i32
      %107 = arith.index_cast %106 : i32 to index
      %c0_73 = arith.constant 0 : index
      %108 = vector.load %arg14[%107, %c0_73] : memref<64x128xf32, #tpu.memory_space<vmem>>, vector<8x128xf32>
      %cst_74 = arith.constant dense<0.000000e+00> : vector<8x128xf32>
      %109 = tpu.matmul %104, %96, %cst_74 {dimension_numbers = #tpu.dot_dimension_numbers<[1], [0], [0], [1], [0, 0, 1, 1], [], []>} : vector<8x128xf32>, vector<128x128xf32>, vector<8x128xf32> -> vector<8x128xf32>
      %110 = arith.addf %108, %109 : vector<8x128xf32>
      %111 = math.tanh %110 : vector<8x128xf32>
      %112 = arith.index_cast %106 : i32 to index
      %c0_75 = arith.constant 0 : index
      %113 = vector.load %arg13[%112, %c0_75] : memref<64x128xf32, #tpu.memory_space<vmem>>, vector<8x128xf32>
      tpu.vector_store %arg13[%112, %c0_75], %111 {strides = array<i32>} : memref<64x128xf32, #tpu.memory_space<vmem>>, vector<8x128xf32>,
      %c1_i32_76 = arith.constant 1 : i32
      %c8_i32_77 = arith.constant 8 : i32
      %114 = arith.muli %c1_i32_76, %c8_i32_77 : i32
      %115 = tpu.assume_multiple %114, 8 : i32
      %116 = arith.index_cast %115 : i32 to index
      %c0_78 = arith.constant 0 : index
      %117 = vector.load %arg14[%116, %c0_78] : memref<64x128xf32, #tpu.memory_space<vmem>>, vector<8x128xf32>
      %cst_79 = arith.constant dense<0.000000e+00> : vector<8x128xf32>
      %118 = tpu.matmul %111, %96, %cst_79 {dimension_numbers = #tpu.dot_dimension_numbers<[1], [0], [0], [1], [0, 0, 1, 1], [], []>} : vector<8x128xf32>, vector<128x128xf32>, vector<8x128xf32> -> vector<8x128xf32>
      %119 = arith.addf %117, %118 : vector<8x128xf32>
      %120 = math.tanh %119 : vector<8x128xf32>
      %121 = arith.index_cast %115 : i32 to index
      %c0_80 = arith.constant 0 : index
      %122 = vector.load %arg13[%121, %c0_80] : memref<64x128xf32, #tpu.memory_space<vmem>>, vector<8x128xf32>
      tpu.vector_store %arg13[%121, %c0_80], %120 {strides = array<i32>} : memref<64x128xf32, #tpu.memory_space<vmem>>, vector<8x128xf32>,
      %c2_i32_81 = arith.constant 2 : i32
      %c8_i32_82 = arith.constant 8 : i32
      %123 = arith.muli %c2_i32_81, %c8_i32_82 : i32
      %124 = tpu.assume_multiple %123, 8 : i32
      %125 = arith.index_cast %124 : i32 to index
      %c0_83 = arith.constant 0 : index
      %126 = vector.load %arg14[%125, %c0_83] : memref<64x128xf32, #tpu.memory_space<vmem>>, vector<8x128xf32>
      %cst_84 = arith.constant dense<0.000000e+00> : vector<8x128xf32>
      %127 = tpu.matmul %120, %96, %cst_84 {dimension_numbers = #tpu.dot_dimension_numbers<[1], [0], [0], [1], [0, 0, 1, 1], [], []>} : vector<8x128xf32>, vector<128x128xf32>, vector<8x128xf32> -> vector<8x128xf32>
      %128 = arith.addf %126, %127 : vector<8x128xf32>
      %129 = math.tanh %128 : vector<8x128xf32>
      %130 = arith.index_cast %124 : i32 to index
      %c0_85 = arith.constant 0 : index
      %131 = vector.load %arg13[%130, %c0_85] : memref<64x128xf32, #tpu.memory_space<vmem>>, vector<8x128xf32>
      tpu.vector_store %arg13[%130, %c0_85], %129 {strides = array<i32>} : memref<64x128xf32, #tpu.memory_space<vmem>>, vector<8x128xf32>,
      %c3_i32_86 = arith.constant 3 : i32
      %c8_i32_87 = arith.constant 8 : i32
      %132 = arith.muli %c3_i32_86, %c8_i32_87 : i32
      %133 = tpu.assume_multiple %132, 8 : i32
      %134 = arith.index_cast %133 : i32 to index
      %c0_88 = arith.constant 0 : index
      %135 = vector.load %arg14[%134, %c0_88] : memref<64x128xf32, #tpu.memory_space<vmem>>, vector<8x128xf32>
      %cst_89 = arith.constant dense<0.000000e+00> : vector<8x128xf32>
      %136 = tpu.matmul %129, %96, %cst_89 {dimension_numbers = #tpu.dot_dimension_numbers<[1], [0], [0], [1], [0, 0, 1, 1], [], []>} : vector<8x128xf32>, vector<128x128xf32>, vector<8x128xf32> -> vector<8x128xf32>
      %137 = arith.addf %135, %136 : vector<8x128xf32>
      %138 = math.tanh %137 : vector<8x128xf32>
      %139 = arith.index_cast %133 : i32 to index
      %c0_90 = arith.constant 0 : index
      %140 = vector.load %arg13[%139, %c0_90] : memref<64x128xf32, #tpu.memory_space<vmem>>, vector<8x128xf32>
      tpu.vector_store %arg13[%139, %c0_90], %138 {strides = array<i32>} : memref<64x128xf32, #tpu.memory_space<vmem>>, vector<8x128xf32>,
      %c4_i32_91 = arith.constant 4 : i32
      %c8_i32_92 = arith.constant 8 : i32
      %141 = arith.muli %c4_i32_91, %c8_i32_92 : i32
      %142 = tpu.assume_multiple %141, 8 : i32
      %143 = arith.index_cast %142 : i32 to index
      %c0_93 = arith.constant 0 : index
      %144 = vector.load %arg14[%143, %c0_93] : memref<64x128xf32, #tpu.memory_space<vmem>>, vector<8x128xf32>
      %cst_94 = arith.constant dense<0.000000e+00> : vector<8x128xf32>
      %145 = tpu.matmul %138, %96, %cst_94 {dimension_numbers = #tpu.dot_dimension_numbers<[1], [0], [0], [1], [0, 0, 1, 1], [], []>} : vector<8x128xf32>, vector<128x128xf32>, vector<8x128xf32> -> vector<8x128xf32>
      %146 = arith.addf %144, %145 : vector<8x128xf32>
      %147 = math.tanh %146 : vector<8x128xf32>
      %148 = arith.index_cast %142 : i32 to index
      %c0_95 = arith.constant 0 : index
      %149 = vector.load %arg13[%148, %c0_95] : memref<64x128xf32, #tpu.memory_space<vmem>>, vector<8x128xf32>
      tpu.vector_store %arg13[%148, %c0_95], %147 {strides = array<i32>} : memref<64x128xf32, #tpu.memory_space<vmem>>, vector<8x128xf32>,
      %c5_i32_96 = arith.constant 5 : i32
      %c8_i32_97 = arith.constant 8 : i32
      %150 = arith.muli %c5_i32_96, %c8_i32_97 : i32
      %151 = tpu.assume_multiple %150, 8 : i32
      %152 = arith.index_cast %151 : i32 to index
      %c0_98 = arith.constant 0 : index
      %153 = vector.load %arg14[%152, %c0_98] : memref<64x128xf32, #tpu.memory_space<vmem>>, vector<8x128xf32>
      %cst_99 = arith.constant dense<0.000000e+00> : vector<8x128xf32>
      %154 = tpu.matmul %147, %96, %cst_99 {dimension_numbers = #tpu.dot_dimension_numbers<[1], [0], [0], [1], [0, 0, 1, 1], [], []>} : vector<8x128xf32>, vector<128x128xf32>, vector<8x128xf32> -> vector<8x128xf32>
      %155 = arith.addf %153, %154 : vector<8x128xf32>
      %156 = math.tanh %155 : vector<8x128xf32>
      %157 = arith.index_cast %151 : i32 to index
      %c0_100 = arith.constant 0 : index
      %158 = vector.load %arg13[%157, %c0_100] : memref<64x128xf32, #tpu.memory_space<vmem>>, vector<8x128xf32>
      tpu.vector_store %arg13[%157, %c0_100], %156 {strides = array<i32>} : memref<64x128xf32, #tpu.memory_space<vmem>>, vector<8x128xf32>,
      %c6_i32_101 = arith.constant 6 : i32
      %c8_i32_102 = arith.constant 8 : i32
      %159 = arith.muli %c6_i32_101, %c8_i32_102 : i32
      %160 = tpu.assume_multiple %159, 8 : i32
      %161 = arith.index_cast %160 : i32 to index
      %c0_103 = arith.constant 0 : index
      %162 = vector.load %arg14[%161, %c0_103] : memref<64x128xf32, #tpu.memory_space<vmem>>, vector<8x128xf32>
      %cst_104 = arith.constant dense<0.000000e+00> : vector<8x128xf32>
      %163 = tpu.matmul %156, %96, %cst_104 {dimension_numbers = #tpu.dot_dimension_numbers<[1], [0], [0], [1], [0, 0, 1, 1], [], []>} : vector<8x128xf32>, vector<128x128xf32>, vector<8x128xf32> -> vector<8x128xf32>
      %164 = arith.addf %162, %163 : vector<8x128xf32>
      %165 = math.tanh %164 : vector<8x128xf32>
      %166 = arith.index_cast %160 : i32 to index
      %c0_105 = arith.constant 0 : index
      %167 = vector.load %arg13[%166, %c0_105] : memref<64x128xf32, #tpu.memory_space<vmem>>, vector<8x128xf32>
      tpu.vector_store %arg13[%166, %c0_105], %165 {strides = array<i32>} : memref<64x128xf32, #tpu.memory_space<vmem>>, vector<8x128xf32>,
      %c7_i32_106 = arith.constant 7 : i32
      %c8_i32_107 = arith.constant 8 : i32
      %168 = arith.muli %c7_i32_106, %c8_i32_107 : i32
      %169 = tpu.assume_multiple %168, 8 : i32
      %170 = arith.index_cast %169 : i32 to index
      %c0_108 = arith.constant 0 : index
      %171 = vector.load %arg14[%170, %c0_108] : memref<64x128xf32, #tpu.memory_space<vmem>>, vector<8x128xf32>
      %cst_109 = arith.constant dense<0.000000e+00> : vector<8x128xf32>
      %172 = tpu.matmul %165, %96, %cst_109 {dimension_numbers = #tpu.dot_dimension_numbers<[1], [0], [0], [1], [0, 0, 1, 1], [], []>} : vector<8x128xf32>, vector<128x128xf32>, vector<8x128xf32> -> vector<8x128xf32>
      %173 = arith.addf %171, %172 : vector<8x128xf32>
      %174 = math.tanh %173 : vector<8x128xf32>
      %175 = arith.index_cast %169 : i32 to index
      %c0_110 = arith.constant 0 : index
      %176 = vector.load %arg13[%175, %c0_110] : memref<64x128xf32, #tpu.memory_space<vmem>>, vector<8x128xf32>
      tpu.vector_store %arg13[%175, %c0_110], %174 {strides = array<i32>} : memref<64x128xf32, #tpu.memory_space<vmem>>, vector<8x128xf32>,
      %c8_i32_111 = arith.constant 8 : i32
      %c1_112 = arith.constant 1 : index
      %c0_113 = arith.constant 0 : index
      %c0_114 = arith.constant 0 : index
      %177 = vector.load %arg12[%c1_112, %c0_113, %c0_114] : memref<2x8x128xf32, #tpu.memory_space<vmem>>, vector<1x8x128xf32>
      %178 = vector.shape_cast %177 : vector<1x8x128xf32> to vector<8x128xf32>
      %179 = vector.shape_cast %174 : vector<8x128xf32> to vector<1x8x128xf32>
      tpu.vector_store %arg12[%c1_112, %c0_113, %c0_114], %179 {strides = array<i32>} : memref<2x8x128xf32, #tpu.memory_space<vmem>>, vector<1x8x128xf32>,
    } else {
    }
    %c0 = arith.constant 0 : index
    %c0_1 = arith.constant 0 : index
    %3 = vector.load %arg13[%c0, %c0_1] : memref<64x128xf32, #tpu.memory_space<vmem>>, vector<64x128xf32>
    %c0_2 = arith.constant 0 : index
    %c0_3 = arith.constant 0 : index
    %4 = vector.load %arg9[%c0_2, %c0_3] : memref<128x128xf32, #tpu.memory_space<vmem>>, vector<128x128xf32>
    %cst = arith.constant dense<0.000000e+00> : vector<64x128xf32>
    %5 = tpu.matmul %3, %4, %cst {dimension_numbers = #tpu.dot_dimension_numbers<[1], [0], [0], [1], [0, 0, 1, 1], [], []>} : vector<64x128xf32>, vector<128x128xf32>, vector<64x128xf32> -> vector<64x128xf32>
    %c0_4 = arith.constant 0 : index
    %c0_5 = arith.constant 0 : index
    %6 = vector.load %arg10[%c0_4, %c0_5] : memref<1x128xf32, #tpu.memory_space<vmem>>, vector<1x128xf32>
    %7 = vector.broadcast %6 : vector<1x128xf32> to vector<64x128xf32>
    %8 = arith.addf %5, %7 : vector<64x128xf32>
    %c0_6 = arith.constant 0 : index
    %c0_7 = arith.constant 0 : index
    %9 = vector.load %arg11[%c0_6, %c0_7] : memref<64x128xf32, #tpu.memory_space<vmem>>, vector<64x128xf32>
    tpu.vector_store %arg11[%c0_6, %c0_7], %8 {strides = array<i32>} : memref<64x128xf32, #tpu.memory_space<vmem>>, vector<64x128xf32>,
    return
  }
  func.func @transform_0(%arg0: i32) -> (i32, i32) {
    %c0_i32 = arith.constant 0 : i32
    %c0_i32_0 = arith.constant 0 : i32
    %c0_i32_1 = arith.constant 0 : i32
    return %c0_i32, %c0_i32_0 : i32, i32
  }
  func.func @transform_1(%arg0: i32) -> (i32, i32, i32) {
    %c0_i32 = arith.constant 0 : i32
    %c0_i32_0 = arith.constant 0 : i32
    %c0_i32_1 = arith.constant 0 : i32
    %c0_i32_2 = arith.constant 0 : i32
    return %c0_i32, %c0_i32_0, %c0_i32_1 : i32, i32, i32
  }
  func.func @transform_2(%arg0: i32) -> (i32, i32) {
    %c0_i32 = arith.constant 0 : i32
    %c0_i32_0 = arith.constant 0 : i32
    %c0_i32_1 = arith.constant 0 : i32
    return %c0_i32, %c0_i32_0 : i32, i32
  }
  func.func @transform_3(%arg0: i32) -> (i32, i32) {
    %c0_i32 = arith.constant 0 : i32
    %c0_i32_0 = arith.constant 0 : i32
    %c0_i32_1 = arith.constant 0 : i32
    return %c0_i32, %c0_i32_0 : i32, i32
  }
  func.func @transform_4(%arg0: i32) -> (i32, i32) {
    %c0_i32 = arith.constant 0 : i32
    %c0_i32_0 = arith.constant 0 : i32
    %c0_i32_1 = arith.constant 0 : i32
    return %c0_i32, %c0_i32_0 : i32, i32
  }
  func.func @transform_5(%arg0: i32) -> (i32, i32) {
    %c0_i32 = arith.constant 0 : i32
    %c0_i32_0 = arith.constant 0 : i32
    %c0_i32_1 = arith.constant 0 : i32
    return %c0_i32, %c0_i32_0 : i32, i32
  }
  func.func @transform_6(%arg0: i32) -> (i32, i32) {
    %c0_i32 = arith.constant 0 : i32
    %c0_i32_0 = arith.constant 0 : i32
    %c0_i32_1 = arith.constant 0 : i32
    return %c0_i32, %c0_i32_0 : i32, i32
  }
  func.func @transform_7(%arg0: i32) -> (i32, i32) {
    %c0_i32 = arith.constant 0 : i32
    %c0_i32_0 = arith.constant 0 : i32
    %c0_i32_1 = arith.constant 0 : i32
    return %c0_i32, %c0_i32_0 : i32, i32
  }
  func.func @transform_8(%arg0: i32) -> (i32, i32) {
    %c0_i32 = arith.constant 0 : i32
    %c0_i32_0 = arith.constant 0 : i32
    return %c0_i32, %arg0 : i32, i32
  }
  func.func @transform_9(%arg0: i32) -> (i32, i32) {
    %c0_i32 = arith.constant 0 : i32
    %c0_i32_0 = arith.constant 0 : i32
    return %c0_i32, %arg0 : i32, i32
  }
  func.func @transform_10(%arg0: i32) -> (i32, i32) {
    %c0_i32 = arith.constant 0 : i32
    %c0_i32_0 = arith.constant 0 : i32
    return %c0_i32, %arg0 : i32, i32
  }
  func.func @transform_11(%arg0: i32) -> (i32, i32, i32) {
    %c0_i32 = arith.constant 0 : i32
    %c0_i32_0 = arith.constant 0 : i32
    %c0_i32_1 = arith.constant 0 : i32
    %c0_i32_2 = arith.constant 0 : i32
    return %c0_i32, %c0_i32_0, %c0_i32_1 : i32, i32, i32
  }
}

</mosaic_0001>

<llo_original>
// kernel: tpu_custom_call.1
$region0: #{tpu_custom_call.1}
  #allocation0 [shape = 'u32[]', space=smem, size = 0x4, offset = 0x4, fixed_abs, tag = 'smem constant byte address 0x4 - core index']
  #allocation1 [shape = 'u32[144,128]{1,0:T(1,128)}', space=vmem, size = 0x12000, scoped, tag = 'internal scratch']
  #allocation2 [shape = 'f32[64,128]{1,0:T(8,128)}', space=vmem, size = 0x8000, scoped, tag = 'scratch operand']
  #allocation3 [shape = 'f32[64,128]{1,0:T(8,128)}', space=vmem, size = 0x8000, scoped, tag = 'scratch operand']
  %s0 = inlined_call_operand.hbm [shape: f32[64,128], index: 0, kind: input, shape index: {}]
  %s1 = inlined_call_operand.hbm [shape: f32[2,8,128], index: 1, kind: input, shape index: {}, may-alias: {1,11}]
  %s2 = inlined_call_operand.hbm [shape: f32[128,128], index: 2, kind: input, shape index: {}]
  %s3 = inlined_call_operand.hbm [shape: f32[128,128], index: 3, kind: input, shape index: {}]
  %s4 = inlined_call_operand.vmem [shape: f32[1,128], index: 4, kind: input, shape index: {}]
  %s5 = inlined_call_operand.hbm [shape: f32[128,128], index: 5, kind: input, shape index: {}]
  %s6 = inlined_call_operand.hbm [shape: f32[128,128], index: 6, kind: input, shape index: {}]
  %s7 = inlined_call_operand.vmem [shape: f32[1,128], index: 7, kind: input, shape index: {}]
  %s8 = inlined_call_operand.hbm [shape: f32[128,128], index: 8, kind: input, shape index: {}]
  %s9 = inlined_call_operand.vmem [shape: f32[1,128], index: 9, kind: input, shape index: {}]
  %s10 = inlined_call_operand.hbm [shape: f32[64,128], index: 10, kind: output, shape index: {0}]
  %s11 = inlined_call_operand.hbm [shape: f32[2,8,128], index: 11, kind: output, shape index: {1}, may-alias: {1,11}]
  %12 = xla_tuple %s10, %s11
  %s13 = sld [smem:[#allocation0]]
  $region90: #{tpu_custom_call.1} parent=0
    _
  %s15 = ssub.s32 1, %s13
  %s16 = scalar_select 0, %s15, %s13
  $region1: #{tpu_custom_call.1} parent=0
    #allocation4 [shape = 'u8[32768]{0}', space=vmem, size = 0x8000, scoped, tag = 'input window, operand 0, single buffered']
    #allocation5 [shape = 's32[1]{0}', space=sflag, size = 0x4, scoped, tag = 'scoped memory for tpu_custom_call.1']
    #allocation6 [shape = 's32[1]{0}', space=sflag, size = 0x4, scoped, tag = 'scoped memory for tpu_custom_call.1']
    #allocation7 [shape = 'u8[8192]{0}', space=vmem, size = 0x2000, scoped, tag = 'input window, operand 1, single buffered']
    #allocation8 [shape = 's32[1]{0}', space=sflag, size = 0x4, scoped, tag = 'scoped memory for tpu_custom_call.1']
    #allocation9 [shape = 'u8[65536]{0}', space=vmem, size = 0x10000, scoped, tag = 'input window, operand 2, single buffered']
    #allocation10 [shape = 'u8[65536]{0}', space=vmem, size = 0x10000, scoped, tag = 'input window, operand 3, single buffered']
    #allocation11 [shape = 's32[1]{0}', space=sflag, size = 0x4, scoped, tag = 'scoped memory for tpu_custom_call.1']
    #allocation12 [shape = 'u8[65536]{0}', space=vmem, size = 0x10000, scoped, tag = 'input window, operand 5, single buffered']
    #allocation13 [shape = 'u8[65536]{0}', space=vmem, size = 0x10000, scoped, tag = 'input window, operand 6, single buffered']
    #allocation14 [shape = 's32[1]{0}', space=sflag, size = 0x4, scoped, tag = 'scoped memory for tpu_custom_call.1']
    #allocation15 [shape = 'u8[65536]{0}', space=vmem, size = 0x10000, scoped, tag = 'input window, operand 8, single buffered']
    #allocation16 [shape = 'u8[32768]{0}', space=vmem, size = 0x8000, scoped, tag = 'output window, operand 0, single buffered']
    #allocation17 [shape = 'u8[8192]{0}', space=vmem, size = 0x2000, scoped, tag = 'output window, operand 1, single buffered']
    #allocation18 [shape = 's32[1]{0}', space=sflag, size = 0x4, scoped, tag = 'scoped memory for tpu_custom_call.1']
    %17 = vsyncpa [#allocation5], 0
    %18 = vsyncpa [#allocation8], 0
    %19 = vsyncpa [#allocation11], 0
    %20 = vsyncpa [#allocation14], 0
    %21 = vsyncpa [#allocation6], 0
    %22 = vsyncpa [#allocation18], 0
    // Predicated region
    $region2: #{tpu_custom_call.1} parent=1 // pred_check
      _
    $region3: #{tpu_custom_call.1} parent=1 // pred_check_branch
      %24 = sbr.rel (0) target = $region5
    $region4: #{tpu_custom_call.1} parent=1 // pred_region
      %s26 = ssub.s32 1024, 1024
      %27 = vsyncadd [#allocation5], %s26
      %s28 = sshll.u32 [#allocation4], 4
      %s29 = int_to_ptr.vmem [resolvable:$true] %s28
      %34 = dma.hbm_to_vmem [thread:$0]  %s0, 1024, %s29, [#allocation5], 128, 128, 8
    $region5: #{tpu_custom_call.1} parent=1 // pred_fallthru
      _
    // Predicated region
    $region6: #{tpu_custom_call.1} parent=1 // pred_check
      _
    $region7: #{tpu_custom_call.1} parent=1 // pred_check_branch
      %36 = sbr.rel (0) target = $region9
    $region8: #{tpu_custom_call.1} parent=1 // pred_region
      %s38 = ssub.s32 256, 256
      %39 = vsyncadd [#allocation8], %s38
      %s40 = sshll.u32 [#allocation7], 4
      %s41 = int_to_ptr.vmem [resolvable:$true] %s40
      %46 = dma.hbm_to_vmem [thread:$0]  %s1, 256, %s41, [#allocation8], 128, 128, 8
    $region9: #{tpu_custom_call.1} parent=1 // pred_fallthru
      _
    // Predicated region
    $region10: #{tpu_custom_call.1} parent=1 // pred_check
      _
    $region11: #{tpu_custom_call.1} parent=1 // pred_check_branch
      %48 = sbr.rel (0) target = $region13
    $region12: #{tpu_custom_call.1} parent=1 // pred_region
      %s50 = ssub.s32 2048, 2048
      %51 = vsyncadd [#allocation8], %s50
      %s52 = sshll.u32 [#allocation9], 4
      %s53 = int_to_ptr.vmem [resolvable:$true] %s52
      %58 = dma.hbm_to_vmem [thread:$0]  %s2, 2048, %s53, [#allocation8], 128, 128, 8
    $region13: #{tpu_custom_call.1} parent=1 // pred_fallthru
      _
    // Predicated region
    $region14: #{tpu_custom_call.1} parent=1 // pred_check
      _
    $region15: #{tpu_custom_call.1} parent=1 // pred_check_branch
      %60 = sbr.rel (0) target = $region17
    $region16: #{tpu_custom_call.1} parent=1 // pred_region
      %s62 = ssub.s32 2048, 2048
      %63 = vsyncadd [#allocation11], %s62
      %s64 = sshll.u32 [#allocation10], 4
      %s65 = int_to_ptr.vmem [resolvable:$true] %s64
      %70 = dma.hbm_to_vmem [thread:$0]  %s3, 2048, %s65, [#allocation11], 128, 128, 8
    $region17: #{tpu_custom_call.1} parent=1 // pred_fallthru
      _
    // Predicated region
    $region18: #{tpu_custom_call.1} parent=1 // pred_check
      _
    $region19: #{tpu_custom_call.1} parent=1 // pred_check_branch
      %72 = sbr.rel (0) target = $region21
    $region20: #{tpu_custom_call.1} parent=1 // pred_region
      _
    $region21: #{tpu_custom_call.1} parent=1 // pred_fallthru
      _
    // Predicated region
    $region22: #{tpu_custom_call.1} parent=1 // pred_check
      _
    $region23: #{tpu_custom_call.1} parent=1 // pred_check_branch
      %74 = sbr.rel (0) target = $region25
    $region24: #{tpu_custom_call.1} parent=1 // pred_region
      %s76 = ssub.s32 2048, 2048
      %77 = vsyncadd [#allocation11], %s76
      %s78 = sshll.u32 [#allocation12], 4
      %s79 = int_to_ptr.vmem [resolvable:$true] %s78
      %84 = dma.hbm_to_vmem [thread:$0]  %s5, 2048, %s79, [#allocation11], 128, 128, 8
    $region25: #{tpu_custom_call.1} parent=1 // pred_fallthru
      _
    // Predicated region
    $region26: #{tpu_custom_call.1} parent=1 // pred_check
      _
    $region27: #{tpu_custom_call.1} parent=1 // pred_check_branch
      %86 = sbr.rel (0) target = $region29
    $region28: #{tpu_custom_call.1} parent=1 // pred_region
      %s88 = ssub.s32 2048, 2048
      %89 = vsyncadd [#allocation14], %s88
      %s90 = sshll.u32 [#allocation13], 4
      %s91 = int_to_ptr.vmem [resolvable:$true] %s90
      %96 = dma.hbm_to_vmem [thread:$0]  %s6, 2048, %s91, [#allocation14], 128, 128, 8
    $region29: #{tpu_custom_call.1} parent=1 // pred_fallthru
      _
    // Predicated region
    $region30: #{tpu_custom_call.1} parent=1 // pred_check
      _
    $region31: #{tpu_custom_call.1} parent=1 // pred_check_branch
      %98 = sbr.rel (0) target = $region33
    $region32: #{tpu_custom_call.1} parent=1 // pred_region
      _
    $region33: #{tpu_custom_call.1} parent=1 // pred_fallthru
      _
    // Predicated region
    $region34: #{tpu_custom_call.1} parent=1 // pred_check
      _
    $region35: #{tpu_custom_call.1} parent=1 // pred_check_branch
      %100 = sbr.rel (0) target = $region37
    $region36: #{tpu_custom_call.1} parent=1 // pred_region
      %s102 = ssub.s32 2048, 2048
      %103 = vsyncadd [#allocation14], %s102
      %s104 = sshll.u32 [#allocation15], 4
      %s105 = int_to_ptr.vmem [resolvable:$true] %s104
      %110 = dma.hbm_to_vmem [thread:$0]  %s8, 2048, %s105, [#allocation14], 128, 128, 8
    $region37: #{tpu_custom_call.1} parent=1 // pred_fallthru
      _
    // Predicated region
    $region38: #{tpu_custom_call.1} parent=1 // pred_check
      _
    $region39: #{tpu_custom_call.1} parent=1 // pred_check_branch
      %112 = sbr.rel (0) target = $region41
    $region40: #{tpu_custom_call.1} parent=1 // pred_region
      _
    $region41: #{tpu_custom_call.1} parent=1 // pred_fallthru
      _
    // Predicated region
    $region42: #{tpu_custom_call.1} parent=1 // pred_check
      _
    $region43: #{tpu_custom_call.1} parent=1 // pred_check_branch
      %114 = sbr.rel (0) target = $region45
    $region44: #{tpu_custom_call.1} parent=1 // pred_region
      %115 = dma.done [#allocation5], 1024
    $region45: #{tpu_custom_call.1} parent=1 // pred_fallthru
      _
    // Predicated region
    $region46: #{tpu_custom_call.1} parent=1 // pred_check
      _
    $region47: #{tpu_custom_call.1} parent=1 // pred_check_branch
      %117 = sbr.rel (0) target = $region49
    $region48: #{tpu_custom_call.1} parent=1 // pred_region
      %118 = dma.done [#allocation8], 256
    $region49: #{tpu_custom_call.1} parent=1 // pred_fallthru
      _
    // Predicated region
    $region50: #{tpu_custom_call.1} parent=1 // pred_check
      _
    $region51: #{tpu_custom_call.1} parent=1 // pred_check_branch
      %120 = sbr.rel (0) target = $region53
    $region52: #{tpu_custom_call.1} parent=1 // pred_region
      %121 = dma.done [#allocation8], 2048
    $region53: #{tpu_custom_call.1} parent=1 // pred_fallthru
      _
    // Predicated region
    $region54: #{tpu_custom_call.1} parent=1 // pred_check
      _
    $region55: #{tpu_custom_call.1} parent=1 // pred_check_branch
      %123 = sbr.rel (0) target = $region57
    $region56: #{tpu_custom_call.1} parent=1 // pred_region
      %124 = dma.done [#allocation11], 2048
    $region57: #{tpu_custom_call.1} parent=1 // pred_fallthru
      _
    // Predicated region
    $region58: #{tpu_custom_call.1} parent=1 // pred_check
      _
    $region59: #{tpu_custom_call.1} parent=1 // pred_check_branch
      %126 = sbr.rel (0) target = $region61
    $region60: #{tpu_custom_call.1} parent=1 // pred_region
      %127 = dma.done [#allocation11], 2048
    $region61: #{tpu_custom_call.1} parent=1 // pred_fallthru
      _
    // Predicated region
    $region62: #{tpu_custom_call.1} parent=1 // pred_check
      _
    $region63: #{tpu_custom_call.1} parent=1 // pred_check_branch
      %129 = sbr.rel (0) target = $region65
    $region64: #{tpu_custom_call.1} parent=1 // pred_region
      %130 = dma.done [#allocation14], 2048
    $region65: #{tpu_custom_call.1} parent=1 // pred_fallthru
      _
    // Predicated region
    $region66: #{tpu_custom_call.1} parent=1 // pred_check
      _
    $region67: #{tpu_custom_call.1} parent=1 // pred_check_branch
      %132 = sbr.rel (0) target = $region69
    $region68: #{tpu_custom_call.1} parent=1 // pred_region
      %133 = dma.done [#allocation14], 2048
    $region69: #{tpu_custom_call.1} parent=1 // pred_fallthru
      _
    %p134 = scmp.eq.s32.totalorder 0, 0
    // Predicated region
    $region70: #{tpu_custom_call.1} parent=1 // pred_check
      %p135 = pneg %p134
    $region71: #{tpu_custom_call.1} parent=1 // pred_check_branch
      %137 = sbr.rel (%p135) target = $region73
    $region72: #{tpu_custom_call.1} parent=1 // pred_region
      %v138 = vld [vmem:[#allocation9] sm:$0xff]
      %v139 = vld [vmem:[#allocation9 + $0x8] sm:$0xff]
      %v140 = vld [vmem:[#allocation9 + $0x10] sm:$0xff]
      %v141 = vld [vmem:[#allocation9 + $0x18] sm:$0xff]
      %v142 = vld [vmem:[#allocation9 + $0x20] sm:$0xff]
      %v143 = vld [vmem:[#allocation9 + $0x28] sm:$0xff]
      %v144 = vld [vmem:[#allocation9 + $0x30] sm:$0xff]
      %v145 = vld [vmem:[#allocation9 + $0x38] sm:$0xff]
      %v146 = vld [vmem:[#allocation9 + $0x40] sm:$0xff]
      %v147 = vld [vmem:[#allocation9 + $0x48] sm:$0xff]
      %v148 = vld [vmem:[#allocation9 + $0x50] sm:$0xff]
      %v149 = vld [vmem:[#allocation9 + $0x58] sm:$0xff]
      %v150 = vld [vmem:[#allocation9 + $0x60] sm:$0xff]
      %v151 = vld [vmem:[#allocation9 + $0x68] sm:$0xff]
      %v152 = vld [vmem:[#allocation9 + $0x70] sm:$0xff]
      %v153 = vld [vmem:[#allocation9 + $0x78] sm:$0xff]
      %v154 = vld [vmem:[#allocation10] sm:$0xff]
      %v155 = vld [vmem:[#allocation10 + $0x8] sm:$0xff]
      %v156 = vld [vmem:[#allocation10 + $0x10] sm:$0xff]
      %v157 = vld [vmem:[#allocation10 + $0x18] sm:$0xff]
      %v158 = vld [vmem:[#allocation10 + $0x20] sm:$0xff]
      %v159 = vld [vmem:[#allocation10 + $0x28] sm:$0xff]
      %v160 = vld [vmem:[#allocation10 + $0x30] sm:$0xff]
      %v161 = vld [vmem:[#allocation10 + $0x38] sm:$0xff]
      %v162 = vld [vmem:[#allocation10 + $0x40] sm:$0xff]
      %v163 = vld [vmem:[#allocation10 + $0x48] sm:$0xff]
      %v164 = vld [vmem:[#allocation10 + $0x50] sm:$0xff]
      %v165 = vld [vmem:[#allocation10 + $0x58] sm:$0xff]
      %v166 = vld [vmem:[#allocation10 + $0x60] sm:$0xff]
      %v167 = vld [vmem:[#allocation10 + $0x68] sm:$0xff]
      %v168 = vld [vmem:[#allocation10 + $0x70] sm:$0xff]
      %v169 = vld [vmem:[#allocation10 + $0x78] sm:$0xff]
      %v170 = vld [vmem:[%s4] sm:$0x1]
      %v171 = vld [vmem:[#allocation4] sm:$0xff]
      %v172 = vld [vmem:[#allocation4 + $0x8] sm:$0xff]
      %v173 = vld [vmem:[#allocation4 + $0x10] sm:$0xff]
      %v174 = vld [vmem:[#allocation4 + $0x18] sm:$0xff]
      %v175 = vld [vmem:[#allocation4 + $0x20] sm:$0xff]
      %v176 = vld [vmem:[#allocation4 + $0x28] sm:$0xff]
      %v177 = vld [vmem:[#allocation4 + $0x30] sm:$0xff]
      %v178 = vld [vmem:[#allocation4 + $0x38] sm:$0xff]
      %v180 = vlaneseq
      %v181 = vshrl.u32 %v180, 7
      %v182 = vsub.s32 0, %v181
      %v183 = vrot.slane %v170, %v182
      %185 = vmatprep.subr.mxu0 0.0
      %186 = vmatpush1.msra.mxu0 %v153
      %187 = vmatprep.subr.mxu0 0.0
      %188 = vmatpush1.msra.mxu0 %v152
      %189 = vmatprep.subr.mxu0 0.0
      %190 = vmatpush1.msra.mxu0 %v151
      %191 = vmatprep.subr.mxu0 0.0
      %192 = vmatpush1.msra.mxu0 %v150
      %193 = vmatprep.subr.mxu0 0.0
      %194 = vmatpush1.msra.mxu0 %v149
      %195 = vmatprep.subr.mxu0 0.0
      %196 = vmatpush1.msra.mxu0 %v148
      %197 = vmatprep.subr.mxu0 0.0
      %198 = vmatpush1.msra.mxu0 %v147
      %199 = vmatprep.subr.mxu0 0.0
      %200 = vmatpush1.msra.mxu0 %v146
      %201 = vmatprep.subr.mxu0 0.0
      %202 = vmatpush1.msra.mxu0 %v145
      %203 = vmatprep.subr.mxu0 0.0
      %204 = vmatpush1.msra.mxu0 %v144
      %205 = vmatprep.subr.mxu0 0.0
      %206 = vmatpush1.msra.mxu0 %v143
      %207 = vmatprep.subr.mxu0 0.0
      %208 = vmatpush1.msra.mxu0 %v142
      %209 = vmatprep.subr.mxu0 0.0
      %210 = vmatpush1.msra.mxu0 %v141
      %211 = vmatprep.subr.mxu0 0.0
      %212 = vmatpush1.msra.mxu0 %v140
      %213 = vmatprep.subr.mxu0 0.0
      %214 = vmatpush1.msra.mxu0 %v139
      %215 = vmatprep.subr.mxu0 0.0
      %216 = vmatpush1.msra.mxu0 %v138
      %217 = vmatprep.subr.mxu0 0.0
      %218 = vmatpush2.msra.mxu0 0.0
      %219 = vmatprep.subr.mxu0 0.0
      %220 = vmatpush2.msra.mxu0 0.0
      %221 = vmatprep.subr.mxu0 0.0
      %222 = vmatpush2.msra.mxu0 0.0
      %223 = vmatprep.subr.mxu0 0.0
      %224 = vmatpush2.msra.mxu0 0.0
      %225 = vmatprep.subr.mxu0 0.0
      %226 = vmatpush2.msra.mxu0 0.0
      %227 = vmatprep.subr.mxu0 0.0
      %228 = vmatpush2.msra.mxu0 0.0
      %229 = vmatprep.subr.mxu0 0.0
      %230 = vmatpush2.msra.mxu0 0.0
      %231 = vmatprep.subr.mxu0 0.0
      %232 = vmatpush2.msra.mxu0 0.0
      %233 = vmatprep.subr.mxu0 0.0
      %234 = vmatpush2.msra.mxu0 0.0
      %235 = vmatprep.subr.mxu0 0.0
      %236 = vmatpush2.msra.mxu0 0.0
      %237 = vmatprep.subr.mxu0 0.0
      %238 = vmatpush2.msra.mxu0 0.0
      %239 = vmatprep.subr.mxu0 0.0
      %240 = vmatpush2.msra.mxu0 0.0
      %241 = vmatprep.subr.mxu0 0.0
      %242 = vmatpush2.msra.mxu0 0.0
      %243 = vmatprep.subr.mxu0 0.0
      %244 = vmatpush2.msra.mxu0 0.0
      %245 = vmatprep.subr.mxu0 0.0
      %246 = vmatpush2.msra.mxu0 0.0
      %247 = vmatprep.subr.mxu0 0.0
      %248 = vmatpush2.msra.mxu0 0.0
      %249 = vmatprep.mubr.f32.mxu0 0.0
      %250 = vmatmul.mubr.f32.gmra.mxu0 %v171
      %v251 = vpop.f32.mrf.mxu0
      %v252 = vadd.f32 %v183, %v251
      %v253 = vpop.f32.mrf.mxu0
      %254 = vmatprep.mubr.f32.mxu0 0.0
      %255 = vmatmul.mubr.f32.gmra.mxu0 %v172
      %v256 = vpop.f32.mrf.mxu0
      %v257 = vadd.f32 %v183, %v256
      %v258 = vpop.f32.mrf.mxu0
      %259 = vmatprep.mubr.f32.mxu0 0.0
      %260 = vmatmul.mubr.f32.gmra.mxu0 %v173
      %v261 = vpop.f32.mrf.mxu0
      %v262 = vadd.f32 %v183, %v261
      %v263 = vpop.f32.mrf.mxu0
      %264 = vmatprep.mubr.f32.mxu0 0.0
      %265 = vmatmul.mubr.f32.gmra.mxu0 %v174
      %v266 = vpop.f32.mrf.mxu0
      %v267 = vadd.f32 %v183, %v266
      %v268 = vpop.f32.mrf.mxu0
      %269 = vmatprep.mubr.f32.mxu0 0.0
      %270 = vmatmul.mubr.f32.gmra.mxu0 %v175
      %v271 = vpop.f32.mrf.mxu0
      %v272 = vadd.f32 %v183, %v271
      %v273 = vpop.f32.mrf.mxu0
      %274 = vmatprep.mubr.f32.mxu0 0.0
      %275 = vmatmul.mubr.f32.gmra.mxu0 %v176
      %v276 = vpop.f32.mrf.mxu0
      %v277 = vadd.f32 %v183, %v276
      %v278 = vpop.f32.mrf.mxu0
      %279 = vmatprep.mubr.f32.mxu0 0.0
      %280 = vmatmul.mubr.f32.gmra.mxu0 %v177
      %v281 = vpop.f32.mrf.mxu0
      %v282 = vadd.f32 %v183, %v281
      %v283 = vpop.f32.mrf.mxu0
      %284 = vmatprep.mubr.f32.mxu0 0.0
      %285 = vmatmul.mubr.f32.gmra.mxu0 %v178
      %v286 = vpop.f32.mrf.mxu0
      %v287 = vadd.f32 %v183, %v286
      %v288 = vpop.f32.mrf.mxu0
      %289 = vdwg.mxu0
      %290 = vst [vmem:[#allocation3] sm:$0xff] %v252
      %291 = vst [vmem:[#allocation3 + $0x8] sm:$0xff] %v257
      %292 = vst [vmem:[#allocation3 + $0x10] sm:$0xff] %v262
      %293 = vst [vmem:[#allocation3 + $0x18] sm:$0xff] %v267
      %294 = vst [vmem:[#allocation3 + $0x20] sm:$0xff] %v272
      %295 = vst [vmem:[#allocation3 + $0x28] sm:$0xff] %v277
      %296 = vst [vmem:[#allocation3 + $0x30] sm:$0xff] %v282
      %297 = vst [vmem:[#allocation3 + $0x38] sm:$0xff] %v287
      %v298 = vld [vmem:[#allocation7] sm:$0xff]
      %v299 = vld [vmem:[#allocation3] sm:$0xff]
      %300 = vmatprep.subr.mxu0 0.0
      %301 = vmatpush1.msra.mxu0 %v169
      %302 = vmatprep.subr.mxu0 0.0
      %303 = vmatpush1.msra.mxu0 %v168
      %304 = vmatprep.subr.mxu0 0.0
      %305 = vmatpush1.msra.mxu0 %v167
      %306 = vmatprep.subr.mxu0 0.0
      %307 = vmatpush1.msra.mxu0 %v166
      %308 = vmatprep.subr.mxu0 0.0
      %309 = vmatpush1.msra.mxu0 %v165
      %310 = vmatprep.subr.mxu0 0.0
      %311 = vmatpush1.msra.mxu0 %v164
      %312 = vmatprep.subr.mxu0 0.0
      %313 = vmatpush1.msra.mxu0 %v163
      %314 = vmatprep.subr.mxu0 0.0
      %315 = vmatpush1.msra.mxu0 %v162
      %316 = vmatprep.subr.mxu0 0.0
      %317 = vmatpush1.msra.mxu0 %v161
      %318 = vmatprep.subr.mxu0 0.0
      %319 = vmatpush1.msra.mxu0 %v160
      %320 = vmatprep.subr.mxu0 0.0
      %321 = vmatpush1.msra.mxu0 %v159
      %322 = vmatprep.subr.mxu0 0.0
      %323 = vmatpush1.msra.mxu0 %v158
      %324 = vmatprep.subr.mxu0 0.0
      %325 = vmatpush1.msra.mxu0 %v157
      %326 = vmatprep.subr.mxu0 0.0
      %327 = vmatpush1.msra.mxu0 %v156
      %328 = vmatprep.subr.mxu0 0.0
      %329 = vmatpush1.msra.mxu0 %v155
      %330 = vmatprep.subr.mxu0 0.0
      %331 = vmatpush1.msra.mxu0 %v154
      %332 = vmatprep.subr.mxu0 0.0
      %333 = vmatpush2.msra.mxu0 0.0
      %334 = vmatprep.subr.mxu0 0.0
      %335 = vmatpush2.msra.mxu0 0.0
      %336 = vmatprep.subr.mxu0 0.0
      %337 = vmatpush2.msra.mxu0 0.0
      %338 = vmatprep.subr.mxu0 0.0
      %339 = vmatpush2.msra.mxu0 0.0
      %340 = vmatprep.subr.mxu0 0.0
      %341 = vmatpush2.msra.mxu0 0.0
      %342 = vmatprep.subr.mxu0 0.0
      %343 = vmatpush2.msra.mxu0 0.0
      %344 = vmatprep.subr.mxu0 0.0
      %345 = vmatpush2.msra.mxu0 0.0
      %346 = vmatprep.subr.mxu0 0.0
      %347 = vmatpush2.msra.mxu0 0.0
      %348 = vmatprep.subr.mxu0 0.0
      %349 = vmatpush2.msra.mxu0 0.0
      %350 = vmatprep.subr.mxu0 0.0
      %351 = vmatpush2.msra.mxu0 0.0
      %352 = vmatprep.subr.mxu0 0.0
      %353 = vmatpush2.msra.mxu0 0.0
      %354 = vmatprep.subr.mxu0 0.0
      %355 = vmatpush2.msra.mxu0 0.0
      %356 = vmatprep.subr.mxu0 0.0
      %357 = vmatpush2.msra.mxu0 0.0
      %358 = vmatprep.subr.mxu0 0.0
      %359 = vmatpush2.msra.mxu0 0.0
      %360 = vmatprep.subr.mxu0 0.0
      %361 = vmatpush2.msra.mxu0 0.0
      %362 = vmatprep.subr.mxu0 0.0
      %363 = vmatpush2.msra.mxu0 0.0
      %364 = vmatprep.mubr.f32.mxu0 0.0
      %365 = vmatmul.mubr.f32.gmra.mxu0 %v298
      %v366 = vpop.f32.mrf.mxu0
      %v367 = vadd.f32 0.0, %v366
      %v368 = vpop.f32.mrf.mxu0
      %369 = vdwg.mxu0
      %v370 = vadd.f32 %v299, %v367
      %v371 = vtanh.pop %v370
      %372 = vst [vmem:[#allocation2] sm:$0xff] %v371
      %s373 = scalar_lea.vmem [#allocation3], 8
      %v374 = vld [vmem:[%s373] sm:$0xff]
      %375 = vmatprep.subr.mxu0 0.0
      %376 = vmatpush1.msra.mxu0 %v169
      %377 = vmatprep.subr.mxu0 0.0
      %378 = vmatpush1.msra.mxu0 %v168
      %379 = vmatprep.subr.mxu0 0.0
      %380 = vmatpush1.msra.mxu0 %v167
      %381 = vmatprep.subr.mxu0 0.0
      %382 = vmatpush1.msra.mxu0 %v166
      %383 = vmatprep.subr.mxu0 0.0
      %384 = vmatpush1.msra.mxu0 %v165
      %385 = vmatprep.subr.mxu0 0.0
      %386 = vmatpush1.msra.mxu0 %v164
      %387 = vmatprep.subr.mxu0 0.0
      %388 = vmatpush1.msra.mxu0 %v163
      %389 = vmatprep.subr.mxu0 0.0
      %390 = vmatpush1.msra.mxu0 %v162
      %391 = vmatprep.subr.mxu0 0.0
      %392 = vmatpush1.msra.mxu0 %v161
      %393 = vmatprep.subr.mxu0 0.0
      %394 = vmatpush1.msra.mxu0 %v160
      %395 = vmatprep.subr.mxu0 0.0
      %396 = vmatpush1.msra.mxu0 %v159
      %397 = vmatprep.subr.mxu0 0.0
      %398 = vmatpush1.msra.mxu0 %v158
      %399 = vmatprep.subr.mxu0 0.0
      %400 = vmatpush1.msra.mxu0 %v157
      %401 = vmatprep.subr.mxu0 0.0
      %402 = vmatpush1.msra.mxu0 %v156
      %403 = vmatprep.subr.mxu0 0.0
      %404 = vmatpush1.msra.mxu0 %v155
      %405 = vmatprep.subr.mxu0 0.0
      %406 = vmatpush1.msra.mxu0 %v154
      %407 = vmatprep.subr.mxu0 0.0
      %408 = vmatpush2.msra.mxu0 0.0
      %409 = vmatprep.subr.mxu0 0.0
      %410 = vmatpush2.msra.mxu0 0.0
      %411 = vmatprep.subr.mxu0 0.0
      %412 = vmatpush2.msra.mxu0 0.0
      %413 = vmatprep.subr.mxu0 0.0
      %414 = vmatpush2.msra.mxu0 0.0
      %415 = vmatprep.subr.mxu0 0.0
      %416 = vmatpush2.msra.mxu0 0.0
      %417 = vmatprep.subr.mxu0 0.0
      %418 = vmatpush2.msra.mxu0 0.0
      %419 = vmatprep.subr.mxu0 0.0
      %420 = vmatpush2.msra.mxu0 0.0
      %421 = vmatprep.subr.mxu0 0.0
      %422 = vmatpush2.msra.mxu0 0.0
      %423 = vmatprep.subr.mxu0 0.0
      %424 = vmatpush2.msra.mxu0 0.0
      %425 = vmatprep.subr.mxu0 0.0
      %426 = vmatpush2.msra.mxu0 0.0
      %427 = vmatprep.subr.mxu0 0.0
      %428 = vmatpush2.msra.mxu0 0.0
      %429 = vmatprep.subr.mxu0 0.0
      %430 = vmatpush2.msra.mxu0 0.0
      %431 = vmatprep.subr.mxu0 0.0
      %432 = vmatpush2.msra.mxu0 0.0
      %433 = vmatprep.subr.mxu0 0.0
      %434 = vmatpush2.msra.mxu0 0.0
      %435 = vmatprep.subr.mxu0 0.0
      %436 = vmatpush2.msra.mxu0 0.0
      %437 = vmatprep.subr.mxu0 0.0
      %438 = vmatpush2.msra.mxu0 0.0
      %439 = vmatprep.mubr.f32.mxu0 0.0
      %440 = vmatmul.mubr.f32.gmra.mxu0 %v371
      %v441 = vpop.f32.mrf.mxu0
      %v442 = vadd.f32 0.0, %v441
      %v443 = vpop.f32.mrf.mxu0
      %444 = vdwg.mxu0
      %v445 = vadd.f32 %v374, %v442
      %v446 = vtanh.pop %v445
      %s447 = scalar_lea.vmem [#allocation2], 8
      %448 = vst [vmem:[%s447] sm:$0xff] %v446
      %s449 = scalar_lea.vmem [#allocation3], 16
      %v450 = vld [vmem:[%s449] sm:$0xff]
      %451 = vmatprep.subr.mxu0 0.0
      %452 = vmatpush1.msra.mxu0 %v169
      %453 = vmatprep.subr.mxu0 0.0
      %454 = vmatpush1.msra.mxu0 %v168
      %455 = vmatprep.subr.mxu0 0.0
      %456 = vmatpush1.msra.mxu0 %v167
      %457 = vmatprep.subr.mxu0 0.0
      %458 = vmatpush1.msra.mxu0 %v166
      %459 = vmatprep.subr.mxu0 0.0
      %460 = vmatpush1.msra.mxu0 %v165
      %461 = vmatprep.subr.mxu0 0.0
      %462 = vmatpush1.msra.mxu0 %v164
      %463 = vmatprep.subr.mxu0 0.0
      %464 = vmatpush1.msra.mxu0 %v163
      %465 = vmatprep.subr.mxu0 0.0
      %466 = vmatpush1.msra.mxu0 %v162
      %467 = vmatprep.subr.mxu0 0.0
      %468 = vmatpush1.msra.mxu0 %v161
      %469 = vmatprep.subr.mxu0 0.0
      %470 = vmatpush1.msra.mxu0 %v160
      %471 = vmatprep.subr.mxu0 0.0
      %472 = vmatpush1.msra.mxu0 %v159
      %473 = vmatprep.subr.mxu0 0.0
      %474 = vmatpush1.msra.mxu0 %v158
      %475 = vmatprep.subr.mxu0 0.0
      %476 = vmatpush1.msra.mxu0 %v157
      %477 = vmatprep.subr.mxu0 0.0
      %478 = vmatpush1.msra.mxu0 %v156
      %479 = vmatprep.subr.mxu0 0.0
      %480 = vmatpush1.msra.mxu0 %v155
      %481 = vmatprep.subr.mxu0 0.0
      %482 = vmatpush1.msra.mxu0 %v154
      %483 = vmatprep.subr.mxu0 0.0
      %484 = vmatpush2.msra.mxu0 0.0
      %485 = vmatprep.subr.mxu0 0.0
      %486 = vmatpush2.msra.mxu0 0.0
      %487 = vmatprep.subr.mxu0 0.0
      %488 = vmatpush2.msra.mxu0 0.0
      %489 = vmatprep.subr.mxu0 0.0
      %490 = vmatpush2.msra.mxu0 0.0
      %491 = vmatprep.subr.mxu0 0.0
      %492 = vmatpush2.msra.mxu0 0.0
      %493 = vmatprep.subr.mxu0 0.0
      %494 = vmatpush2.msra.mxu0 0.0
      %495 = vmatprep.subr.mxu0 0.0
      %496 = vmatpush2.msra.mxu0 0.0
      %497 = vmatprep.subr.mxu0 0.0
      %498 = vmatpush2.msra.mxu0 0.0
      %499 = vmatprep.subr.mxu0 0.0
      %500 = vmatpush2.msra.mxu0 0.0
      %501 = vmatprep.subr.mxu0 0.0
      %502 = vmatpush2.msra.mxu0 0.0
      %503 = vmatprep.subr.mxu0 0.0
      %504 = vmatpush2.msra.mxu0 0.0
      %505 = vmatprep.subr.mxu0 0.0
      %506 = vmatpush2.msra.mxu0 0.0
      %507 = vmatprep.subr.mxu0 0.0
      %508 = vmatpush2.msra.mxu0 0.0
      %509 = vmatprep.subr.mxu0 0.0
      %510 = vmatpush2.msra.mxu0 0.0
      %511 = vmatprep.subr.mxu0 0.0
      %512 = vmatpush2.msra.mxu0 0.0
      %513 = vmatprep.subr.mxu0 0.0
      %514 = vmatpush2.msra.mxu0 0.0
      %515 = vmatprep.mubr.f32.mxu0 0.0
      %516 = vmatmul.mubr.f32.gmra.mxu0 %v446
      %v517 = vpop.f32.mrf.mxu0
      %v518 = vadd.f32 0.0, %v517
      %v519 = vpop.f32.mrf.mxu0
      %520 = vdwg.mxu0
      %v521 = vadd.f32 %v450, %v518
      %v522 = vtanh.pop %v521
      %s523 = scalar_lea.vmem [#allocation2], 16
      %524 = vst [vmem:[%s523] sm:$0xff] %v522
      %s525 = scalar_lea.vmem [#allocation3], 24
      %v526 = vld [vmem:[%s525] sm:$0xff]
      %527 = vmatprep.subr.mxu0 0.0
      %528 = vmatpush1.msra.mxu0 %v169
      %529 = vmatprep.subr.mxu0 0.0
      %530 = vmatpush1.msra.mxu0 %v168
      %531 = vmatprep.subr.mxu0 0.0
      %532 = vmatpush1.msra.mxu0 %v167
      %533 = vmatprep.subr.mxu0 0.0
      %534 = vmatpush1.msra.mxu0 %v166
      %535 = vmatprep.subr.mxu0 0.0
      %536 = vmatpush1.msra.mxu0 %v165
      %537 = vmatprep.subr.mxu0 0.0
      %538 = vmatpush1.msra.mxu0 %v164
      %539 = vmatprep.subr.mxu0 0.0
      %540 = vmatpush1.msra.mxu0 %v163
      %541 = vmatprep.subr.mxu0 0.0
      %542 = vmatpush1.msra.mxu0 %v162
      %543 = vmatprep.subr.mxu0 0.0
      %544 = vmatpush1.msra.mxu0 %v161
      %545 = vmatprep.subr.mxu0 0.0
      %546 = vmatpush1.msra.mxu0 %v160
      %547 = vmatprep.subr.mxu0 0.0
      %548 = vmatpush1.msra.mxu0 %v159
      %549 = vmatprep.subr.mxu0 0.0
      %550 = vmatpush1.msra.mxu0 %v158
      %551 = vmatprep.subr.mxu0 0.0
      %552 = vmatpush1.msra.mxu0 %v157
      %553 = vmatprep.subr.mxu0 0.0
      %554 = vmatpush1.msra.mxu0 %v156
      %555 = vmatprep.subr.mxu0 0.0
      %556 = vmatpush1.msra.mxu0 %v155
      %557 = vmatprep.subr.mxu0 0.0
      %558 = vmatpush1.msra.mxu0 %v154
      %559 = vmatprep.subr.mxu0 0.0
      %560 = vmatpush2.msra.mxu0 0.0
      %561 = vmatprep.subr.mxu0 0.0
      %562 = vmatpush2.msra.mxu0 0.0
      %563 = vmatprep.subr.mxu0 0.0
      %564 = vmatpush2.msra.mxu0 0.0
      %565 = vmatprep.subr.mxu0 0.0
      %566 = vmatpush2.msra.mxu0 0.0
      %567 = vmatprep.subr.mxu0 0.0
      %568 = vmatpush2.msra.mxu0 0.0
      %569 = vmatprep.subr.mxu0 0.0
      %570 = vmatpush2.msra.mxu0 0.0
      %571 = vmatprep.subr.mxu0 0.0
      %572 = vmatpush2.msra.mxu0 0.0
      %573 = vmatprep.subr.mxu0 0.0
      %574 = vmatpush2.msra.mxu0 0.0
      %575 = vmatprep.subr.mxu0 0.0
      %576 = vmatpush2.msra.mxu0 0.0
      %577 = vmatprep.subr.mxu0 0.0
      %578 = vmatpush2.msra.mxu0 0.0
      %579 = vmatprep.subr.mxu0 0.0
      %580 = vmatpush2.msra.mxu0 0.0
      %581 = vmatprep.subr.mxu0 0.0
      %582 = vmatpush2.msra.mxu0 0.0
      %583 = vmatprep.subr.mxu0 0.0
      %584 = vmatpush2.msra.mxu0 0.0
      %585 = vmatprep.subr.mxu0 0.0
      %586 = vmatpush2.msra.mxu0 0.0
      %587 = vmatprep.subr.mxu0 0.0
      %588 = vmatpush2.msra.mxu0 0.0
      %589 = vmatprep.subr.mxu0 0.0
      %590 = vmatpush2.msra.mxu0 0.0
      %591 = vmatprep.mubr.f32.mxu0 0.0
      %592 = vmatmul.mubr.f32.gmra.mxu0 %v522
      %v593 = vpop.f32.mrf.mxu0
      %v594 = vadd.f32 0.0, %v593
      %v595 = vpop.f32.mrf.mxu0
      %596 = vdwg.mxu0
      %v597 = vadd.f32 %v526, %v594
      %v598 = vtanh.pop %v597
      %s599 = scalar_lea.vmem [#allocation2], 24
      %600 = vst [vmem:[%s599] sm:$0xff] %v598
      %s601 = scalar_lea.vmem [#allocation3], 32
      %v602 = vld [vmem:[%s601] sm:$0xff]
      %603 = vmatprep.subr.mxu0 0.0
      %604 = vmatpush1.msra.mxu0 %v169
      %605 = vmatprep.subr.mxu0 0.0
      %606 = vmatpush1.msra.mxu0 %v168
      %607 = vmatprep.subr.mxu0 0.0
      %608 = vmatpush1.msra.mxu0 %v167
      %609 = vmatprep.subr.mxu0 0.0
      %610 = vmatpush1.msra.mxu0 %v166
      %611 = vmatprep.subr.mxu0 0.0
      %612 = vmatpush1.msra.mxu0 %v165
      %613 = vmatprep.subr.mxu0 0.0
      %614 = vmatpush1.msra.mxu0 %v164
      %615 = vmatprep.subr.mxu0 0.0
      %616 = vmatpush1.msra.mxu0 %v163
      %617 = vmatprep.subr.mxu0 0.0
      %618 = vmatpush1.msra.mxu0 %v162
      %619 = vmatprep.subr.mxu0 0.0
      %620 = vmatpush1.msra.mxu0 %v161
      %621 = vmatprep.subr.mxu0 0.0
      %622 = vmatpush1.msra.mxu0 %v160
      %623 = vmatprep.subr.mxu0 0.0
      %624 = vmatpush1.msra.mxu0 %v159
      %625 = vmatprep.subr.mxu0 0.0
      %626 = vmatpush1.msra.mxu0 %v158
      %627 = vmatprep.subr.mxu0 0.0
      %628 = vmatpush1.msra.mxu0 %v157
      %629 = vmatprep.subr.mxu0 0.0
      %630 = vmatpush1.msra.mxu0 %v156
      %631 = vmatprep.subr.mxu0 0.0
      %632 = vmatpush1.msra.mxu0 %v155
      %633 = vmatprep.subr.mxu0 0.0
      %634 = vmatpush1.msra.mxu0 %v154
      %635 = vmatprep.subr.mxu0 0.0
      %636 = vmatpush2.msra.mxu0 0.0
      %637 = vmatprep.subr.mxu0 0.0
      %638 = vmatpush2.msra.mxu0 0.0
      %639 = vmatprep.subr.mxu0 0.0
      %640 = vmatpush2.msra.mxu0 0.0
      %641 = vmatprep.subr.mxu0 0.0
      %642 = vmatpush2.msra.mxu0 0.0
      %643 = vmatprep.subr.mxu0 0.0
      %644 = vmatpush2.msra.mxu0 0.0
      %645 = vmatprep.subr.mxu0 0.0
      %646 = vmatpush2.msra.mxu0 0.0
      %647 = vmatprep.subr.mxu0 0.0
      %648 = vmatpush2.msra.mxu0 0.0
      %649 = vmatprep.subr.mxu0 0.0
      %650 = vmatpush2.msra.mxu0 0.0
      %651 = vmatprep.subr.mxu0 0.0
      %652 = vmatpush2.msra.mxu0 0.0
      %653 = vmatprep.subr.mxu0 0.0
      %654 = vmatpush2.msra.mxu0 0.0
      %655 = vmatprep.subr.mxu0 0.0
      %656 = vmatpush2.msra.mxu0 0.0
      %657 = vmatprep.subr.mxu0 0.0
      %658 = vmatpush2.msra.mxu0 0.0
      %659 = vmatprep.subr.mxu0 0.0
      %660 = vmatpush2.msra.mxu0 0.0
      %661 = vmatprep.subr.mxu0 0.0
      %662 = vmatpush2.msra.mxu0 0.0
      %663 = vmatprep.subr.mxu0 0.0
      %664 = vmatpush2.msra.mxu0 0.0
      %665 = vmatprep.subr.mxu0 0.0
      %666 = vmatpush2.msra.mxu0 0.0
      %667 = vmatprep.mubr.f32.mxu0 0.0
      %668 = vmatmul.mubr.f32.gmra.mxu0 %v598
      %v669 = vpop.f32.mrf.mxu0
      %v670 = vadd.f32 0.0, %v669
      %v671 = vpop.f32.mrf.mxu0
      %672 = vdwg.mxu0
      %v673 = vadd.f32 %v602, %v670
      %v674 = vtanh.pop %v673
      %s675 = scalar_lea.vmem [#allocation2], 32
      %676 = vst [vmem:[%s675] sm:$0xff] %v674
      %s677 = scalar_lea.vmem [#allocation3], 40
      %v678 = vld [vmem:[%s677] sm:$0xff]
      %679 = vmatprep.subr.mxu0 0.0
      %680 = vmatpush1.msra.mxu0 %v169
      %681 = vmatprep.subr.mxu0 0.0
      %682 = vmatpush1.msra.mxu0 %v168
      %683 = vmatprep.subr.mxu0 0.0
      %684 = vmatpush1.msra.mxu0 %v167
      %685 = vmatprep.subr.mxu0 0.0
      %686 = vmatpush1.msra.mxu0 %v166
      %687 = vmatprep.subr.mxu0 0.0
      %688 = vmatpush1.msra.mxu0 %v165
      %689 = vmatprep.subr.mxu0 0.0
      %690 = vmatpush1.msra.mxu0 %v164
      %691 = vmatprep.subr.mxu0 0.0
      %692 = vmatpush1.msra.mxu0 %v163
      %693 = vmatprep.subr.mxu0 0.0
      %694 = vmatpush1.msra.mxu0 %v162
      %695 = vmatprep.subr.mxu0 0.0
      %696 = vmatpush1.msra.mxu0 %v161
      %697 = vmatprep.subr.mxu0 0.0
      %698 = vmatpush1.msra.mxu0 %v160
      %699 = vmatprep.subr.mxu0 0.0
      %700 = vmatpush1.msra.mxu0 %v159
      %701 = vmatprep.subr.mxu0 0.0
      %702 = vmatpush1.msra.mxu0 %v158
      %703 = vmatprep.subr.mxu0 0.0
      %704 = vmatpush1.msra.mxu0 %v157
      %705 = vmatprep.subr.mxu0 0.0
      %706 = vmatpush1.msra.mxu0 %v156
      %707 = vmatprep.subr.mxu0 0.0
      %708 = vmatpush1.msra.mxu0 %v155
      %709 = vmatprep.subr.mxu0 0.0
      %710 = vmatpush1.msra.mxu0 %v154
      %711 = vmatprep.subr.mxu0 0.0
      %712 = vmatpush2.msra.mxu0 0.0
      %713 = vmatprep.subr.mxu0 0.0
      %714 = vmatpush2.msra.mxu0 0.0
      %715 = vmatprep.subr.mxu0 0.0
      %716 = vmatpush2.msra.mxu0 0.0
      %717 = vmatprep.subr.mxu0 0.0
      %718 = vmatpush2.msra.mxu0 0.0
      %719 = vmatprep.subr.mxu0 0.0
      %720 = vmatpush2.msra.mxu0 0.0
      %721 = vmatprep.subr.mxu0 0.0
      %722 = vmatpush2.msra.mxu0 0.0
      %723 = vmatprep.subr.mxu0 0.0
      %724 = vmatpush2.msra.mxu0 0.0
      %725 = vmatprep.subr.mxu0 0.0
      %726 = vmatpush2.msra.mxu0 0.0
      %727 = vmatprep.subr.mxu0 0.0
      %728 = vmatpush2.msra.mxu0 0.0
      %729 = vmatprep.subr.mxu0 0.0
      %730 = vmatpush2.msra.mxu0 0.0
      %731 = vmatprep.subr.mxu0 0.0
      %732 = vmatpush2.msra.mxu0 0.0
      %733 = vmatprep.subr.mxu0 0.0
      %734 = vmatpush2.msra.mxu0 0.0
      %735 = vmatprep.subr.mxu0 0.0
      %736 = vmatpush2.msra.mxu0 0.0
      %737 = vmatprep.subr.mxu0 0.0
      %738 = vmatpush2.msra.mxu0 0.0
      %739 = vmatprep.subr.mxu0 0.0
      %740 = vmatpush2.msra.mxu0 0.0
      %741 = vmatprep.subr.mxu0 0.0
      %742 = vmatpush2.msra.mxu0 0.0
      %743 = vmatprep.mubr.f32.mxu0 0.0
      %744 = vmatmul.mubr.f32.gmra.mxu0 %v674
      %v745 = vpop.f32.mrf.mxu0
      %v746 = vadd.f32 0.0, %v745
      %v747 = vpop.f32.mrf.mxu0
      %748 = vdwg.mxu0
      %v749 = vadd.f32 %v678, %v746
      %v750 = vtanh.pop %v749
      %s751 = scalar_lea.vmem [#allocation2], 40
      %752 = vst [vmem:[%s751] sm:$0xff] %v750
      %s753 = scalar_lea.vmem [#allocation3], 48
      %v754 = vld [vmem:[%s753] sm:$0xff]
      %755 = vmatprep.subr.mxu0 0.0
      %756 = vmatpush1.msra.mxu0 %v169
      %757 = vmatprep.subr.mxu0 0.0
      %758 = vmatpush1.msra.mxu0 %v168
      %759 = vmatprep.subr.mxu0 0.0
      %760 = vmatpush1.msra.mxu0 %v167
      %761 = vmatprep.subr.mxu0 0.0
      %762 = vmatpush1.msra.mxu0 %v166
      %763 = vmatprep.subr.mxu0 0.0
      %764 = vmatpush1.msra.mxu0 %v165
      %765 = vmatprep.subr.mxu0 0.0
      %766 = vmatpush1.msra.mxu0 %v164
      %767 = vmatprep.subr.mxu0 0.0
      %768 = vmatpush1.msra.mxu0 %v163
      %769 = vmatprep.subr.mxu0 0.0
      %770 = vmatpush1.msra.mxu0 %v162
      %771 = vmatprep.subr.mxu0 0.0
      %772 = vmatpush1.msra.mxu0 %v161
      %773 = vmatprep.subr.mxu0 0.0
      %774 = vmatpush1.msra.mxu0 %v160
      %775 = vmatprep.subr.mxu0 0.0
      %776 = vmatpush1.msra.mxu0 %v159
      %777 = vmatprep.subr.mxu0 0.0
      %778 = vmatpush1.msra.mxu0 %v158
      %779 = vmatprep.subr.mxu0 0.0
      %780 = vmatpush1.msra.mxu0 %v157
      %781 = vmatprep.subr.mxu0 0.0
      %782 = vmatpush1.msra.mxu0 %v156
      %783 = vmatprep.subr.mxu0 0.0
      %784 = vmatpush1.msra.mxu0 %v155
      %785 = vmatprep.subr.mxu0 0.0
      %786 = vmatpush1.msra.mxu0 %v154
      %787 = vmatprep.subr.mxu0 0.0
      %788 = vmatpush2.msra.mxu0 0.0
      %789 = vmatprep.subr.mxu0 0.0
      %790 = vmatpush2.msra.mxu0 0.0
      %791 = vmatprep.subr.mxu0 0.0
      %792 = vmatpush2.msra.mxu0 0.0
      %793 = vmatprep.subr.mxu0 0.0
      %794 = vmatpush2.msra.mxu0 0.0
      %795 = vmatprep.subr.mxu0 0.0
      %796 = vmatpush2.msra.mxu0 0.0
      %797 = vmatprep.subr.mxu0 0.0
      %798 = vmatpush2.msra.mxu0 0.0
      %799 = vmatprep.subr.mxu0 0.0
      %800 = vmatpush2.msra.mxu0 0.0
      %801 = vmatprep.subr.mxu0 0.0
      %802 = vmatpush2.msra.mxu0 0.0
      %803 = vmatprep.subr.mxu0 0.0
      %804 = vmatpush2.msra.mxu0 0.0
      %805 = vmatprep.subr.mxu0 0.0
      %806 = vmatpush2.msra.mxu0 0.0
      %807 = vmatprep.subr.mxu0 0.0
      %808 = vmatpush2.msra.mxu0 0.0
      %809 = vmatprep.subr.mxu0 0.0
      %810 = vmatpush2.msra.mxu0 0.0
      %811 = vmatprep.subr.mxu0 0.0
      %812 = vmatpush2.msra.mxu0 0.0
      %813 = vmatprep.subr.mxu0 0.0
      %814 = vmatpush2.msra.mxu0 0.0
      %815 = vmatprep.subr.mxu0 0.0
      %816 = vmatpush2.msra.mxu0 0.0
      %817 = vmatprep.subr.mxu0 0.0
      %818 = vmatpush2.msra.mxu0 0.0
      %819 = vmatprep.mubr.f32.mxu0 0.0
      %820 = vmatmul.mubr.f32.gmra.mxu0 %v750
      %v821 = vpop.f32.mrf.mxu0
      %v822 = vadd.f32 0.0, %v821
      %v823 = vpop.f32.mrf.mxu0
      %824 = vdwg.mxu0
      %v825 = vadd.f32 %v754, %v822
      %v826 = vtanh.pop %v825
      %s827 = scalar_lea.vmem [#allocation2], 48
      %828 = vst [vmem:[%s827] sm:$0xff] %v826
      %s829 = scalar_lea.vmem [#allocation3], 56
      %v830 = vld [vmem:[%s829] sm:$0xff]
      %831 = vmatprep.subr.mxu0 0.0
      %832 = vmatpush1.msra.mxu0 %v169
      %833 = vmatprep.subr.mxu0 0.0
      %834 = vmatpush1.msra.mxu0 %v168
      %835 = vmatprep.subr.mxu0 0.0
      %836 = vmatpush1.msra.mxu0 %v167
      %837 = vmatprep.subr.mxu0 0.0
      %838 = vmatpush1.msra.mxu0 %v166
      %839 = vmatprep.subr.mxu0 0.0
      %840 = vmatpush1.msra.mxu0 %v165
      %841 = vmatprep.subr.mxu0 0.0
      %842 = vmatpush1.msra.mxu0 %v164
      %843 = vmatprep.subr.mxu0 0.0
      %844 = vmatpush1.msra.mxu0 %v163
      %845 = vmatprep.subr.mxu0 0.0
      %846 = vmatpush1.msra.mxu0 %v162
      %847 = vmatprep.subr.mxu0 0.0
      %848 = vmatpush1.msra.mxu0 %v161
      %849 = vmatprep.subr.mxu0 0.0
      %850 = vmatpush1.msra.mxu0 %v160
      %851 = vmatprep.subr.mxu0 0.0
      %852 = vmatpush1.msra.mxu0 %v159
      %853 = vmatprep.subr.mxu0 0.0
      %854 = vmatpush1.msra.mxu0 %v158
      %855 = vmatprep.subr.mxu0 0.0
      %856 = vmatpush1.msra.mxu0 %v157
      %857 = vmatprep.subr.mxu0 0.0
      %858 = vmatpush1.msra.mxu0 %v156
      %859 = vmatprep.subr.mxu0 0.0
      %860 = vmatpush1.msra.mxu0 %v155
      %861 = vmatprep.subr.mxu0 0.0
      %862 = vmatpush1.msra.mxu0 %v154
      %863 = vmatprep.subr.mxu0 0.0
      %864 = vmatpush2.msra.mxu0 0.0
      %865 = vmatprep.subr.mxu0 0.0
      %866 = vmatpush2.msra.mxu0 0.0
      %867 = vmatprep.subr.mxu0 0.0
      %868 = vmatpush2.msra.mxu0 0.0
      %869 = vmatprep.subr.mxu0 0.0
      %870 = vmatpush2.msra.mxu0 0.0
      %871 = vmatprep.subr.mxu0 0.0
      %872 = vmatpush2.msra.mxu0 0.0
      %873 = vmatprep.subr.mxu0 0.0
      %874 = vmatpush2.msra.mxu0 0.0
      %875 = vmatprep.subr.mxu0 0.0
      %876 = vmatpush2.msra.mxu0 0.0
      %877 = vmatprep.subr.mxu0 0.0
      %878 = vmatpush2.msra.mxu0 0.0
      %879 = vmatprep.subr.mxu0 0.0
      %880 = vmatpush2.msra.mxu0 0.0
      %881 = vmatprep.subr.mxu0 0.0
      %882 = vmatpush2.msra.mxu0 0.0
      %883 = vmatprep.subr.mxu0 0.0
      %884 = vmatpush2.msra.mxu0 0.0
      %885 = vmatprep.subr.mxu0 0.0
      %886 = vmatpush2.msra.mxu0 0.0
      %887 = vmatprep.subr.mxu0 0.0
      %888 = vmatpush2.msra.mxu0 0.0
      %889 = vmatprep.subr.mxu0 0.0
      %890 = vmatpush2.msra.mxu0 0.0
      %891 = vmatprep.subr.mxu0 0.0
      %892 = vmatpush2.msra.mxu0 0.0
      %893 = vmatprep.subr.mxu0 0.0
      %894 = vmatpush2.msra.mxu0 0.0
      %895 = vmatprep.mubr.f32.mxu0 0.0
      %896 = vmatmul.mubr.f32.gmra.mxu0 %v826
      %v897 = vpop.f32.mrf.mxu0
      %v898 = vadd.f32 0.0, %v897
      %v899 = vpop.f32.mrf.mxu0
      %900 = vdwg.mxu0
      %v901 = vadd.f32 %v830, %v898
      %v902 = vtanh.pop %v901
      %s903 = scalar_lea.vmem [#allocation2], 56
      %904 = vst [vmem:[%s903] sm:$0xff] %v902
      %905 = vst [vmem:[#allocation17] sm:$0xff] %v902
      %v906 = vld [vmem:[#allocation12] sm:$0xff]
      %v907 = vld [vmem:[#allocation12 + $0x8] sm:$0xff]
      %v908 = vld [vmem:[#allocation12 + $0x10] sm:$0xff]
      %v909 = vld [vmem:[#allocation12 + $0x18] sm:$0xff]
      %v910 = vld [vmem:[#allocation12 + $0x20] sm:$0xff]
      %v911 = vld [vmem:[#allocation12 + $0x28] sm:$0xff]
      %v912 = vld [vmem:[#allocation12 + $0x30] sm:$0xff]
      %v913 = vld [vmem:[#allocation12 + $0x38] sm:$0xff]
      %v914 = vld [vmem:[#allocation12 + $0x40] sm:$0xff]
      %v915 = vld [vmem:[#allocation12 + $0x48] sm:$0xff]
      %v916 = vld [vmem:[#allocation12 + $0x50] sm:$0xff]
      %v917 = vld [vmem:[#allocation12 + $0x58] sm:$0xff]
      %v918 = vld [vmem:[#allocation12 + $0x60] sm:$0xff]
      %v919 = vld [vmem:[#allocation12 + $0x68] sm:$0xff]
      %v920 = vld [vmem:[#allocation12 + $0x70] sm:$0xff]
      %v921 = vld [vmem:[#allocation12 + $0x78] sm:$0xff]
      %v922 = vld [vmem:[#allocation13] sm:$0xff]
      %v923 = vld [vmem:[#allocation13 + $0x8] sm:$0xff]
      %v924 = vld [vmem:[#allocation13 + $0x10] sm:$0xff]
      %v925 = vld [vmem:[#allocation13 + $0x18] sm:$0xff]
      %v926 = vld [vmem:[#allocation13 + $0x20] sm:$0xff]
      %v927 = vld [vmem:[#allocation13 + $0x28] sm:$0xff]
      %v928 = vld [vmem:[#allocation13 + $0x30] sm:$0xff]
      %v929 = vld [vmem:[#allocation13 + $0x38] sm:$0xff]
      %v930 = vld [vmem:[#allocation13 + $0x40] sm:$0xff]
      %v931 = vld [vmem:[#allocation13 + $0x48] sm:$0xff]
      %v932 = vld [vmem:[#allocation13 + $0x50] sm:$0xff]
      %v933 = vld [vmem:[#allocation13 + $0x58] sm:$0xff]
      %v934 = vld [vmem:[#allocation13 + $0x60] sm:$0xff]
      %v935 = vld [vmem:[#allocation13 + $0x68] sm:$0xff]
      %v936 = vld [vmem:[#allocation13 + $0x70] sm:$0xff]
      %v937 = vld [vmem:[#allocation13 + $0x78] sm:$0xff]
      %v938 = vld [vmem:[%s7] sm:$0x1]
      %v939 = vld [vmem:[#allocation2] sm:$0xff]
      %v940 = vld [vmem:[#allocation2 + $0x8] sm:$0xff]
      %v941 = vld [vmem:[#allocation2 + $0x10] sm:$0xff]
      %v942 = vld [vmem:[#allocation2 + $0x18] sm:$0xff]
      %v943 = vld [vmem:[#allocation2 + $0x20] sm:$0xff]
      %v944 = vld [vmem:[#allocation2 + $0x28] sm:$0xff]
      %v945 = vld [vmem:[#allocation2 + $0x30] sm:$0xff]
      %v946 = vld [vmem:[#allocation2 + $0x38] sm:$0xff]
      %v948 = vlaneseq
      %v949 = vshrl.u32 %v948, 7
      %v950 = vsub.s32 0, %v949
      %v951 = vrot.slane %v938, %v950
      %953 = vmatprep.subr.mxu0 0.0
      %954 = vmatpush1.msra.mxu0 %v921
      %955 = vmatprep.subr.mxu0 0.0
      %956 = vmatpush1.msra.mxu0 %v920
      %957 = vmatprep.subr.mxu0 0.0
      %958 = vmatpush1.msra.mxu0 %v919
      %959 = vmatprep.subr.mxu0 0.0
      %960 = vmatpush1.msra.mxu0 %v918
      %961 = vmatprep.subr.mxu0 0.0
      %962 = vmatpush1.msra.mxu0 %v917
      %963 = vmatprep.subr.mxu0 0.0
      %964 = vmatpush1.msra.mxu0 %v916
      %965 = vmatprep.subr.mxu0 0.0
      %966 = vmatpush1.msra.mxu0 %v915
      %967 = vmatprep.subr.mxu0 0.0
      %968 = vmatpush1.msra.mxu0 %v914
      %969 = vmatprep.subr.mxu0 0.0
      %970 = vmatpush1.msra.mxu0 %v913
      %971 = vmatprep.subr.mxu0 0.0
      %972 = vmatpush1.msra.mxu0 %v912
      %973 = vmatprep.subr.mxu0 0.0
      %974 = vmatpush1.msra.mxu0 %v911
      %975 = vmatprep.subr.mxu0 0.0
      %976 = vmatpush1.msra.mxu0 %v910
      %977 = vmatprep.subr.mxu0 0.0
      %978 = vmatpush1.msra.mxu0 %v909
      %979 = vmatprep.subr.mxu0 0.0
      %980 = vmatpush1.msra.mxu0 %v908
      %981 = vmatprep.subr.mxu0 0.0
      %982 = vmatpush1.msra.mxu0 %v907
      %983 = vmatprep.subr.mxu0 0.0
      %984 = vmatpush1.msra.mxu0 %v906
      %985 = vmatprep.subr.mxu0 0.0
      %986 = vmatpush2.msra.mxu0 0.0
      %987 = vmatprep.subr.mxu0 0.0
      %988 = vmatpush2.msra.mxu0 0.0
      %989 = vmatprep.subr.mxu0 0.0
      %990 = vmatpush2.msra.mxu0 0.0
      %991 = vmatprep.subr.mxu0 0.0
      %992 = vmatpush2.msra.mxu0 0.0
      %993 = vmatprep.subr.mxu0 0.0
      %994 = vmatpush2.msra.mxu0 0.0
      %995 = vmatprep.subr.mxu0 0.0
      %996 = vmatpush2.msra.mxu0 0.0
      %997 = vmatprep.subr.mxu0 0.0
      %998 = vmatpush2.msra.mxu0 0.0
      %999 = vmatprep.subr.mxu0 0.0
      %1000 = vmatpush2.msra.mxu0 0.0
      %1001 = vmatprep.subr.mxu0 0.0
      %1002 = vmatpush2.msra.mxu0 0.0
      %1003 = vmatprep.subr.mxu0 0.0
      %1004 = vmatpush2.msra.mxu0 0.0
      %1005 = vmatprep.subr.mxu0 0.0
      %1006 = vmatpush2.msra.mxu0 0.0
      %1007 = vmatprep.subr.mxu0 0.0
      %1008 = vmatpush2.msra.mxu0 0.0
      %1009 = vmatprep.subr.mxu0 0.0
      %1010 = vmatpush2.msra.mxu0 0.0
      %1011 = vmatprep.subr.mxu0 0.0
      %1012 = vmatpush2.msra.mxu0 0.0
      %1013 = vmatprep.subr.mxu0 0.0
      %1014 = vmatpush2.msra.mxu0 0.0
      %1015 = vmatprep.subr.mxu0 0.0
      %1016 = vmatpush2.msra.mxu0 0.0
      %1017 = vmatprep.mubr.f32.mxu0 0.0
      %1018 = vmatmul.mubr.f32.gmra.mxu0 %v939
      %v1019 = vpop.f32.mrf.mxu0
      %v1020 = vadd.f32 %v951, %v1019
      %v1021 = vpop.f32.mrf.mxu0
      %1022 = vmatprep.mubr.f32.mxu0 0.0
      %1023 = vmatmul.mubr.f32.gmra.mxu0 %v940
      %v1024 = vpop.f32.mrf.mxu0
      %v1025 = vadd.f32 %v951, %v1024
      %v1026 = vpop.f32.mrf.mxu0
      %1027 = vmatprep.mubr.f32.mxu0 0.0
      %1028 = vmatmul.mubr.f32.gmra.mxu0 %v941
      %v1029 = vpop.f32.mrf.mxu0
      %v1030 = vadd.f32 %v951, %v1029
      %v1031 = vpop.f32.mrf.mxu0
      %1032 = vmatprep.mubr.f32.mxu0 0.0
      %1033 = vmatmul.mubr.f32.gmra.mxu0 %v942
      %v1034 = vpop.f32.mrf.mxu0
      %v1035 = vadd.f32 %v951, %v1034
      %v1036 = vpop.f32.mrf.mxu0
      %1037 = vmatprep.mubr.f32.mxu0 0.0
      %1038 = vmatmul.mubr.f32.gmra.mxu0 %v943
      %v1039 = vpop.f32.mrf.mxu0
      %v1040 = vadd.f32 %v951, %v1039
      %v1041 = vpop.f32.mrf.mxu0
      %1042 = vmatprep.mubr.f32.mxu0 0.0
      %1043 = vmatmul.mubr.f32.gmra.mxu0 %v944
      %v1044 = vpop.f32.mrf.mxu0
      %v1045 = vadd.f32 %v951, %v1044
      %v1046 = vpop.f32.mrf.mxu0
      %1047 = vmatprep.mubr.f32.mxu0 0.0
      %1048 = vmatmul.mubr.f32.gmra.mxu0 %v945
      %v1049 = vpop.f32.mrf.mxu0
      %v1050 = vadd.f32 %v951, %v1049
      %v1051 = vpop.f32.mrf.mxu0
      %1052 = vmatprep.mubr.f32.mxu0 0.0
      %1053 = vmatmul.mubr.f32.gmra.mxu0 %v946
      %v1054 = vpop.f32.mrf.mxu0
      %v1055 = vadd.f32 %v951, %v1054
      %v1056 = vpop.f32.mrf.mxu0
      %1057 = vdwg.mxu0
      %1058 = vst [vmem:[#allocation3] sm:$0xff] %v1020
      %1059 = vst [vmem:[#allocation3 + $0x8] sm:$0xff] %v1025
      %1060 = vst [vmem:[#allocation3 + $0x10] sm:$0xff] %v1030
      %1061 = vst [vmem:[#allocation3 + $0x18] sm:$0xff] %v1035
      %1062 = vst [vmem:[#allocation3 + $0x20] sm:$0xff] %v1040
      %1063 = vst [vmem:[#allocation3 + $0x28] sm:$0xff] %v1045
      %1064 = vst [vmem:[#allocation3 + $0x30] sm:$0xff] %v1050
      %1065 = vst [vmem:[#allocation3 + $0x38] sm:$0xff] %v1055
      %s1066 = scalar_lea.vmem [#allocation7], 8
      %v1067 = vld [vmem:[%s1066] sm:$0xff]
      %v1068 = vld [vmem:[#allocation3] sm:$0xff]
      %1069 = vmatprep.subr.mxu0 0.0
      %1070 = vmatpush1.msra.mxu0 %v937
      %1071 = vmatprep.subr.mxu0 0.0
      %1072 = vmatpush1.msra.mxu0 %v936
      %1073 = vmatprep.subr.mxu0 0.0
      %1074 = vmatpush1.msra.mxu0 %v935
      %1075 = vmatprep.subr.mxu0 0.0
      %1076 = vmatpush1.msra.mxu0 %v934
      %1077 = vmatprep.subr.mxu0 0.0
      %1078 = vmatpush1.msra.mxu0 %v933
      %1079 = vmatprep.subr.mxu0 0.0
      %1080 = vmatpush1.msra.mxu0 %v932
      %1081 = vmatprep.subr.mxu0 0.0
      %1082 = vmatpush1.msra.mxu0 %v931
      %1083 = vmatprep.subr.mxu0 0.0
      %1084 = vmatpush1.msra.mxu0 %v930
      %1085 = vmatprep.subr.mxu0 0.0
      %1086 = vmatpush1.msra.mxu0 %v929
      %1087 = vmatprep.subr.mxu0 0.0
      %1088 = vmatpush1.msra.mxu0 %v928
      %1089 = vmatprep.subr.mxu0 0.0
      %1090 = vmatpush1.msra.mxu0 %v927
      %1091 = vmatprep.subr.mxu0 0.0
      %1092 = vmatpush1.msra.mxu0 %v926
      %1093 = vmatprep.subr.mxu0 0.0
      %1094 = vmatpush1.msra.mxu0 %v925
      %1095 = vmatprep.subr.mxu0 0.0
      %1096 = vmatpush1.msra.mxu0 %v924
      %1097 = vmatprep.subr.mxu0 0.0
      %1098 = vmatpush1.msra.mxu0 %v923
      %1099 = vmatprep.subr.mxu0 0.0
      %1100 = vmatpush1.msra.mxu0 %v922
      %1101 = vmatprep.subr.mxu0 0.0
      %1102 = vmatpush2.msra.mxu0 0.0
      %1103 = vmatprep.subr.mxu0 0.0
      %1104 = vmatpush2.msra.mxu0 0.0
      %1105 = vmatprep.subr.mxu0 0.0
      %1106 = vmatpush2.msra.mxu0 0.0
      %1107 = vmatprep.subr.mxu0 0.0
      %1108 = vmatpush2.msra.mxu0 0.0
      %1109 = vmatprep.subr.mxu0 0.0
      %1110 = vmatpush2.msra.mxu0 0.0
      %1111 = vmatprep.subr.mxu0 0.0
      %1112 = vmatpush2.msra.mxu0 0.0
      %1113 = vmatprep.subr.mxu0 0.0
      %1114 = vmatpush2.msra.mxu0 0.0
      %1115 = vmatprep.subr.mxu0 0.0
      %1116 = vmatpush2.msra.mxu0 0.0
      %1117 = vmatprep.subr.mxu0 0.0
      %1118 = vmatpush2.msra.mxu0 0.0
      %1119 = vmatprep.subr.mxu0 0.0
      %1120 = vmatpush2.msra.mxu0 0.0
      %1121 = vmatprep.subr.mxu0 0.0
      %1122 = vmatpush2.msra.mxu0 0.0
      %1123 = vmatprep.subr.mxu0 0.0
      %1124 = vmatpush2.msra.mxu0 0.0
      %1125 = vmatprep.subr.mxu0 0.0
      %1126 = vmatpush2.msra.mxu0 0.0
      %1127 = vmatprep.subr.mxu0 0.0
      %1128 = vmatpush2.msra.mxu0 0.0
      %1129 = vmatprep.subr.mxu0 0.0
      %1130 = vmatpush2.msra.mxu0 0.0
      %1131 = vmatprep.subr.mxu0 0.0
      %1132 = vmatpush2.msra.mxu0 0.0
      %1133 = vmatprep.mubr.f32.mxu0 0.0
      %1134 = vmatmul.mubr.f32.gmra.mxu0 %v1067
      %v1135 = vpop.f32.mrf.mxu0
      %v1136 = vadd.f32 0.0, %v1135
      %v1137 = vpop.f32.mrf.mxu0
      %1138 = vdwg.mxu0
      %v1139 = vadd.f32 %v1068, %v1136
      %v1140 = vtanh.pop %v1139
      %1141 = vst [vmem:[#allocation2] sm:$0xff] %v1140
      %v1142 = vld [vmem:[%s373] sm:$0xff]
      %1143 = vmatprep.subr.mxu0 0.0
      %1144 = vmatpush1.msra.mxu0 %v937
      %1145 = vmatprep.subr.mxu0 0.0
      %1146 = vmatpush1.msra.mxu0 %v936
      %1147 = vmatprep.subr.mxu0 0.0
      %1148 = vmatpush1.msra.mxu0 %v935
      %1149 = vmatprep.subr.mxu0 0.0
      %1150 = vmatpush1.msra.mxu0 %v934
      %1151 = vmatprep.subr.mxu0 0.0
      %1152 = vmatpush1.msra.mxu0 %v933
      %1153 = vmatprep.subr.mxu0 0.0
      %1154 = vmatpush1.msra.mxu0 %v932
      %1155 = vmatprep.subr.mxu0 0.0
      %1156 = vmatpush1.msra.mxu0 %v931
      %1157 = vmatprep.subr.mxu0 0.0
      %1158 = vmatpush1.msra.mxu0 %v930
      %1159 = vmatprep.subr.mxu0 0.0
      %1160 = vmatpush1.msra.mxu0 %v929
      %1161 = vmatprep.subr.mxu0 0.0
      %1162 = vmatpush1.msra.mxu0 %v928
      %1163 = vmatprep.subr.mxu0 0.0
      %1164 = vmatpush1.msra.mxu0 %v927
      %1165 = vmatprep.subr.mxu0 0.0
      %1166 = vmatpush1.msra.mxu0 %v926
      %1167 = vmatprep.subr.mxu0 0.0
      %1168 = vmatpush1.msra.mxu0 %v925
      %1169 = vmatprep.subr.mxu0 0.0
      %1170 = vmatpush1.msra.mxu0 %v924
      %1171 = vmatprep.subr.mxu0 0.0
      %1172 = vmatpush1.msra.mxu0 %v923
      %1173 = vmatprep.subr.mxu0 0.0
      %1174 = vmatpush1.msra.mxu0 %v922
      %1175 = vmatprep.subr.mxu0 0.0
      %1176 = vmatpush2.msra.mxu0 0.0
      %1177 = vmatprep.subr.mxu0 0.0
      %1178 = vmatpush2.msra.mxu0 0.0
      %1179 = vmatprep.subr.mxu0 0.0
      %1180 = vmatpush2.msra.mxu0 0.0
      %1181 = vmatprep.subr.mxu0 0.0
      %1182 = vmatpush2.msra.mxu0 0.0
      %1183 = vmatprep.subr.mxu0 0.0
      %1184 = vmatpush2.msra.mxu0 0.0
      %1185 = vmatprep.subr.mxu0 0.0
      %1186 = vmatpush2.msra.mxu0 0.0
      %1187 = vmatprep.subr.mxu0 0.0
      %1188 = vmatpush2.msra.mxu0 0.0
      %1189 = vmatprep.subr.mxu0 0.0
      %1190 = vmatpush2.msra.mxu0 0.0
      %1191 = vmatprep.subr.mxu0 0.0
      %1192 = vmatpush2.msra.mxu0 0.0
      %1193 = vmatprep.subr.mxu0 0.0
      %1194 = vmatpush2.msra.mxu0 0.0
      %1195 = vmatprep.subr.mxu0 0.0
      %1196 = vmatpush2.msra.mxu0 0.0
      %1197 = vmatprep.subr.mxu0 0.0
      %1198 = vmatpush2.msra.mxu0 0.0
      %1199 = vmatprep.subr.mxu0 0.0
      %1200 = vmatpush2.msra.mxu0 0.0
      %1201 = vmatprep.subr.mxu0 0.0
      %1202 = vmatpush2.msra.mxu0 0.0
      %1203 = vmatprep.subr.mxu0 0.0
      %1204 = vmatpush2.msra.mxu0 0.0
      %1205 = vmatprep.subr.mxu0 0.0
      %1206 = vmatpush2.msra.mxu0 0.0
      %1207 = vmatprep.mubr.f32.mxu0 0.0
      %1208 = vmatmul.mubr.f32.gmra.mxu0 %v1140
      %v1209 = vpop.f32.mrf.mxu0
      %v1210 = vadd.f32 0.0, %v1209
      %v1211 = vpop.f32.mrf.mxu0
      %1212 = vdwg.mxu0
      %v1213 = vadd.f32 %v1142, %v1210
      %v1214 = vtanh.pop %v1213
      %1215 = vst [vmem:[%s447] sm:$0xff] %v1214
      %v1216 = vld [vmem:[%s449] sm:$0xff]
      %1217 = vmatprep.subr.mxu0 0.0
      %1218 = vmatpush1.msra.mxu0 %v937
      %1219 = vmatprep.subr.mxu0 0.0
      %1220 = vmatpush1.msra.mxu0 %v936
      %1221 = vmatprep.subr.mxu0 0.0
      %1222 = vmatpush1.msra.mxu0 %v935
      %1223 = vmatprep.subr.mxu0 0.0
      %1224 = vmatpush1.msra.mxu0 %v934
      %1225 = vmatprep.subr.mxu0 0.0
      %1226 = vmatpush1.msra.mxu0 %v933
      %1227 = vmatprep.subr.mxu0 0.0
      %1228 = vmatpush1.msra.mxu0 %v932
      %1229 = vmatprep.subr.mxu0 0.0
      %1230 = vmatpush1.msra.mxu0 %v931
      %1231 = vmatprep.subr.mxu0 0.0
      %1232 = vmatpush1.msra.mxu0 %v930
      %1233 = vmatprep.subr.mxu0 0.0
      %1234 = vmatpush1.msra.mxu0 %v929
      %1235 = vmatprep.subr.mxu0 0.0
      %1236 = vmatpush1.msra.mxu0 %v928
      %1237 = vmatprep.subr.mxu0 0.0
      %1238 = vmatpush1.msra.mxu0 %v927
      %1239 = vmatprep.subr.mxu0 0.0
      %1240 = vmatpush1.msra.mxu0 %v926
      %1241 = vmatprep.subr.mxu0 0.0
      %1242 = vmatpush1.msra.mxu0 %v925
      %1243 = vmatprep.subr.mxu0 0.0
      %1244 = vmatpush1.msra.mxu0 %v924
      %1245 = vmatprep.subr.mxu0 0.0
      %1246 = vmatpush1.msra.mxu0 %v923
      %1247 = vmatprep.subr.mxu0 0.0
      %1248 = vmatpush1.msra.mxu0 %v922
      %1249 = vmatprep.subr.mxu0 0.0
      %1250 = vmatpush2.msra.mxu0 0.0
      %1251 = vmatprep.subr.mxu0 0.0
      %1252 = vmatpush2.msra.mxu0 0.0
      %1253 = vmatprep.subr.mxu0 0.0
      %1254 = vmatpush2.msra.mxu0 0.0
      %1255 = vmatprep.subr.mxu0 0.0
      %1256 = vmatpush2.msra.mxu0 0.0
      %1257 = vmatprep.subr.mxu0 0.0
      %1258 = vmatpush2.msra.mxu0 0.0
      %1259 = vmatprep.subr.mxu0 0.0
      %1260 = vmatpush2.msra.mxu0 0.0
      %1261 = vmatprep.subr.mxu0 0.0
      %1262 = vmatpush2.msra.mxu0 0.0
      %1263 = vmatprep.subr.mxu0 0.0
      %1264 = vmatpush2.msra.mxu0 0.0
      %1265 = vmatprep.subr.mxu0 0.0
      %1266 = vmatpush2.msra.mxu0 0.0
      %1267 = vmatprep.subr.mxu0 0.0
      %1268 = vmatpush2.msra.mxu0 0.0
      %1269 = vmatprep.subr.mxu0 0.0
      %1270 = vmatpush2.msra.mxu0 0.0
      %1271 = vmatprep.subr.mxu0 0.0
      %1272 = vmatpush2.msra.mxu0 0.0
      %1273 = vmatprep.subr.mxu0 0.0
      %1274 = vmatpush2.msra.mxu0 0.0
      %1275 = vmatprep.subr.mxu0 0.0
      %1276 = vmatpush2.msra.mxu0 0.0
      %1277 = vmatprep.subr.mxu0 0.0
      %1278 = vmatpush2.msra.mxu0 0.0
      %1279 = vmatprep.subr.mxu0 0.0
      %1280 = vmatpush2.msra.mxu0 0.0
      %1281 = vmatprep.mubr.f32.mxu0 0.0
      %1282 = vmatmul.mubr.f32.gmra.mxu0 %v1214
      %v1283 = vpop.f32.mrf.mxu0
      %v1284 = vadd.f32 0.0, %v1283
      %v1285 = vpop.f32.mrf.mxu0
      %1286 = vdwg.mxu0
      %v1287 = vadd.f32 %v1216, %v1284
      %v1288 = vtanh.pop %v1287
      %1289 = vst [vmem:[%s523] sm:$0xff] %v1288
      %v1290 = vld [vmem:[%s525] sm:$0xff]
      %1291 = vmatprep.subr.mxu0 0.0
      %1292 = vmatpush1.msra.mxu0 %v937
      %1293 = vmatprep.subr.mxu0 0.0
      %1294 = vmatpush1.msra.mxu0 %v936
      %1295 = vmatprep.subr.mxu0 0.0
      %1296 = vmatpush1.msra.mxu0 %v935
      %1297 = vmatprep.subr.mxu0 0.0
      %1298 = vmatpush1.msra.mxu0 %v934
      %1299 = vmatprep.subr.mxu0 0.0
      %1300 = vmatpush1.msra.mxu0 %v933
      %1301 = vmatprep.subr.mxu0 0.0
      %1302 = vmatpush1.msra.mxu0 %v932
      %1303 = vmatprep.subr.mxu0 0.0
      %1304 = vmatpush1.msra.mxu0 %v931
      %1305 = vmatprep.subr.mxu0 0.0
      %1306 = vmatpush1.msra.mxu0 %v930
      %1307 = vmatprep.subr.mxu0 0.0
      %1308 = vmatpush1.msra.mxu0 %v929
      %1309 = vmatprep.subr.mxu0 0.0
      %1310 = vmatpush1.msra.mxu0 %v928
      %1311 = vmatprep.subr.mxu0 0.0
      %1312 = vmatpush1.msra.mxu0 %v927
      %1313 = vmatprep.subr.mxu0 0.0
      %1314 = vmatpush1.msra.mxu0 %v926
      %1315 = vmatprep.subr.mxu0 0.0
      %1316 = vmatpush1.msra.mxu0 %v925
      %1317 = vmatprep.subr.mxu0 0.0
      %1318 = vmatpush1.msra.mxu0 %v924
      %1319 = vmatprep.subr.mxu0 0.0
      %1320 = vmatpush1.msra.mxu0 %v923
      %1321 = vmatprep.subr.mxu0 0.0
      %1322 = vmatpush1.msra.mxu0 %v922
      %1323 = vmatprep.subr.mxu0 0.0
      %1324 = vmatpush2.msra.mxu0 0.0
      %1325 = vmatprep.subr.mxu0 0.0
      %1326 = vmatpush2.msra.mxu0 0.0
      %1327 = vmatprep.subr.mxu0 0.0
      %1328 = vmatpush2.msra.mxu0 0.0
      %1329 = vmatprep.subr.mxu0 0.0
      %1330 = vmatpush2.msra.mxu0 0.0
      %1331 = vmatprep.subr.mxu0 0.0
      %1332 = vmatpush2.msra.mxu0 0.0
      %1333 = vmatprep.subr.mxu0 0.0
      %1334 = vmatpush2.msra.mxu0 0.0
      %1335 = vmatprep.subr.mxu0 0.0
      %1336 = vmatpush2.msra.mxu0 0.0
      %1337 = vmatprep.subr.mxu0 0.0
      %1338 = vmatpush2.msra.mxu0 0.0
      %1339 = vmatprep.subr.mxu0 0.0
      %1340 = vmatpush2.msra.mxu0 0.0
      %1341 = vmatprep.subr.mxu0 0.0
      %1342 = vmatpush2.msra.mxu0 0.0
      %1343 = vmatprep.subr.mxu0 0.0
      %1344 = vmatpush2.msra.mxu0 0.0
      %1345 = vmatprep.subr.mxu0 0.0
      %1346 = vmatpush2.msra.mxu0 0.0
      %1347 = vmatprep.subr.mxu0 0.0
      %1348 = vmatpush2.msra.mxu0 0.0
      %1349 = vmatprep.subr.mxu0 0.0
      %1350 = vmatpush2.msra.mxu0 0.0
      %1351 = vmatprep.subr.mxu0 0.0
      %1352 = vmatpush2.msra.mxu0 0.0
      %1353 = vmatprep.subr.mxu0 0.0
      %1354 = vmatpush2.msra.mxu0 0.0
      %1355 = vmatprep.mubr.f32.mxu0 0.0
      %1356 = vmatmul.mubr.f32.gmra.mxu0 %v1288
      %v1357 = vpop.f32.mrf.mxu0
      %v1358 = vadd.f32 0.0, %v1357
      %v1359 = vpop.f32.mrf.mxu0
      %1360 = vdwg.mxu0
      %v1361 = vadd.f32 %v1290, %v1358
      %v1362 = vtanh.pop %v1361
      %1363 = vst [vmem:[%s599] sm:$0xff] %v1362
      %v1364 = vld [vmem:[%s601] sm:$0xff]
      %1365 = vmatprep.subr.mxu0 0.0
      %1366 = vmatpush1.msra.mxu0 %v937
      %1367 = vmatprep.subr.mxu0 0.0
      %1368 = vmatpush1.msra.mxu0 %v936
      %1369 = vmatprep.subr.mxu0 0.0
      %1370 = vmatpush1.msra.mxu0 %v935
      %1371 = vmatprep.subr.mxu0 0.0
      %1372 = vmatpush1.msra.mxu0 %v934
      %1373 = vmatprep.subr.mxu0 0.0
      %1374 = vmatpush1.msra.mxu0 %v933
      %1375 = vmatprep.subr.mxu0 0.0
      %1376 = vmatpush1.msra.mxu0 %v932
      %1377 = vmatprep.subr.mxu0 0.0
      %1378 = vmatpush1.msra.mxu0 %v931
      %1379 = vmatprep.subr.mxu0 0.0
      %1380 = vmatpush1.msra.mxu0 %v930
      %1381 = vmatprep.subr.mxu0 0.0
      %1382 = vmatpush1.msra.mxu0 %v929
      %1383 = vmatprep.subr.mxu0 0.0
      %1384 = vmatpush1.msra.mxu0 %v928
      %1385 = vmatprep.subr.mxu0 0.0
      %1386 = vmatpush1.msra.mxu0 %v927
      %1387 = vmatprep.subr.mxu0 0.0
      %1388 = vmatpush1.msra.mxu0 %v926
      %1389 = vmatprep.subr.mxu0 0.0
      %1390 = vmatpush1.msra.mxu0 %v925
      %1391 = vmatprep.subr.mxu0 0.0
      %1392 = vmatpush1.msra.mxu0 %v924
      %1393 = vmatprep.subr.mxu0 0.0
      %1394 = vmatpush1.msra.mxu0 %v923
      %1395 = vmatprep.subr.mxu0 0.0
      %1396 = vmatpush1.msra.mxu0 %v922
      %1397 = vmatprep.subr.mxu0 0.0
      %1398 = vmatpush2.msra.mxu0 0.0
      %1399 = vmatprep.subr.mxu0 0.0
      %1400 = vmatpush2.msra.mxu0 0.0
      %1401 = vmatprep.subr.mxu0 0.0
      %1402 = vmatpush2.msra.mxu0 0.0
      %1403 = vmatprep.subr.mxu0 0.0
      %1404 = vmatpush2.msra.mxu0 0.0
      %1405 = vmatprep.subr.mxu0 0.0
      %1406 = vmatpush2.msra.mxu0 0.0
      %1407 = vmatprep.subr.mxu0 0.0
      %1408 = vmatpush2.msra.mxu0 0.0
      %1409 = vmatprep.subr.mxu0 0.0
      %1410 = vmatpush2.msra.mxu0 0.0
      %1411 = vmatprep.subr.mxu0 0.0
      %1412 = vmatpush2.msra.mxu0 0.0
      %1413 = vmatprep.subr.mxu0 0.0
      %1414 = vmatpush2.msra.mxu0 0.0
      %1415 = vmatprep.subr.mxu0 0.0
      %1416 = vmatpush2.msra.mxu0 0.0
      %1417 = vmatprep.subr.mxu0 0.0
      %1418 = vmatpush2.msra.mxu0 0.0
      %1419 = vmatprep.subr.mxu0 0.0
      %1420 = vmatpush2.msra.mxu0 0.0
      %1421 = vmatprep.subr.mxu0 0.0
      %1422 = vmatpush2.msra.mxu0 0.0
      %1423 = vmatprep.subr.mxu0 0.0
      %1424 = vmatpush2.msra.mxu0 0.0
      %1425 = vmatprep.subr.mxu0 0.0
      %1426 = vmatpush2.msra.mxu0 0.0
      %1427 = vmatprep.subr.mxu0 0.0
      %1428 = vmatpush2.msra.mxu0 0.0
      %1429 = vmatprep.mubr.f32.mxu0 0.0
      %1430 = vmatmul.mubr.f32.gmra.mxu0 %v1362
      %v1431 = vpop.f32.mrf.mxu0
      %v1432 = vadd.f32 0.0, %v1431
      %v1433 = vpop.f32.mrf.mxu0
      %1434 = vdwg.mxu0
      %v1435 = vadd.f32 %v1364, %v1432
      %v1436 = vtanh.pop %v1435
      %1437 = vst [vmem:[%s675] sm:$0xff] %v1436
      %v1438 = vld [vmem:[%s677] sm:$0xff]
      %1439 = vmatprep.subr.mxu0 0.0
      %1440 = vmatpush1.msra.mxu0 %v937
      %1441 = vmatprep.subr.mxu0 0.0
      %1442 = vmatpush1.msra.mxu0 %v936
      %1443 = vmatprep.subr.mxu0 0.0
      %1444 = vmatpush1.msra.mxu0 %v935
      %1445 = vmatprep.subr.mxu0 0.0
      %1446 = vmatpush1.msra.mxu0 %v934
      %1447 = vmatprep.subr.mxu0 0.0
      %1448 = vmatpush1.msra.mxu0 %v933
      %1449 = vmatprep.subr.mxu0 0.0
      %1450 = vmatpush1.msra.mxu0 %v932
      %1451 = vmatprep.subr.mxu0 0.0
      %1452 = vmatpush1.msra.mxu0 %v931
      %1453 = vmatprep.subr.mxu0 0.0
      %1454 = vmatpush1.msra.mxu0 %v930
      %1455 = vmatprep.subr.mxu0 0.0
      %1456 = vmatpush1.msra.mxu0 %v929
      %1457 = vmatprep.subr.mxu0 0.0
      %1458 = vmatpush1.msra.mxu0 %v928
      %1459 = vmatprep.subr.mxu0 0.0
      %1460 = vmatpush1.msra.mxu0 %v927
      %1461 = vmatprep.subr.mxu0 0.0
      %1462 = vmatpush1.msra.mxu0 %v926
      %1463 = vmatprep.subr.mxu0 0.0
      %1464 = vmatpush1.msra.mxu0 %v925
      %1465 = vmatprep.subr.mxu0 0.0
      %1466 = vmatpush1.msra.mxu0 %v924
      %1467 = vmatprep.subr.mxu0 0.0
      %1468 = vmatpush1.msra.mxu0 %v923
      %1469 = vmatprep.subr.mxu0 0.0
      %1470 = vmatpush1.msra.mxu0 %v922
      %1471 = vmatprep.subr.mxu0 0.0
      %1472 = vmatpush2.msra.mxu0 0.0
      %1473 = vmatprep.subr.mxu0 0.0
      %1474 = vmatpush2.msra.mxu0 0.0
      %1475 = vmatprep.subr.mxu0 0.0
      %1476 = vmatpush2.msra.mxu0 0.0
      %1477 = vmatprep.subr.mxu0 0.0
      %1478 = vmatpush2.msra.mxu0 0.0
      %1479 = vmatprep.subr.mxu0 0.0
      %1480 = vmatpush2.msra.mxu0 0.0
      %1481 = vmatprep.subr.mxu0 0.0
      %1482 = vmatpush2.msra.mxu0 0.0
      %1483 = vmatprep.subr.mxu0 0.0
      %1484 = vmatpush2.msra.mxu0 0.0
      %1485 = vmatprep.subr.mxu0 0.0
      %1486 = vmatpush2.msra.mxu0 0.0
      %1487 = vmatprep.subr.mxu0 0.0
      %1488 = vmatpush2.msra.mxu0 0.0
      %1489 = vmatprep.subr.mxu0 0.0
      %1490 = vmatpush2.msra.mxu0 0.0
      %1491 = vmatprep.subr.mxu0 0.0
      %1492 = vmatpush2.msra.mxu0 0.0
      %1493 = vmatprep.subr.mxu0 0.0
      %1494 = vmatpush2.msra.mxu0 0.0
      %1495 = vmatprep.subr.mxu0 0.0
      %1496 = vmatpush2.msra.mxu0 0.0
      %1497 = vmatprep.subr.mxu0 0.0
      %1498 = vmatpush2.msra.mxu0 0.0
      %1499 = vmatprep.subr.mxu0 0.0
      %1500 = vmatpush2.msra.mxu0 0.0
      %1501 = vmatprep.subr.mxu0 0.0
      %1502 = vmatpush2.msra.mxu0 0.0
      %1503 = vmatprep.mubr.f32.mxu0 0.0
      %1504 = vmatmul.mubr.f32.gmra.mxu0 %v1436
      %v1505 = vpop.f32.mrf.mxu0
      %v1506 = vadd.f32 0.0, %v1505
      %v1507 = vpop.f32.mrf.mxu0
      %1508 = vdwg.mxu0
      %v1509 = vadd.f32 %v1438, %v1506
      %v1510 = vtanh.pop %v1509
      %1511 = vst [vmem:[%s751] sm:$0xff] %v1510
      %v1512 = vld [vmem:[%s753] sm:$0xff]
      %1513 = vmatprep.subr.mxu0 0.0
      %1514 = vmatpush1.msra.mxu0 %v937
      %1515 = vmatprep.subr.mxu0 0.0
      %1516 = vmatpush1.msra.mxu0 %v936
      %1517 = vmatprep.subr.mxu0 0.0
      %1518 = vmatpush1.msra.mxu0 %v935
      %1519 = vmatprep.subr.mxu0 0.0
      %1520 = vmatpush1.msra.mxu0 %v934
      %1521 = vmatprep.subr.mxu0 0.0
      %1522 = vmatpush1.msra.mxu0 %v933
      %1523 = vmatprep.subr.mxu0 0.0
      %1524 = vmatpush1.msra.mxu0 %v932
      %1525 = vmatprep.subr.mxu0 0.0
      %1526 = vmatpush1.msra.mxu0 %v931
      %1527 = vmatprep.subr.mxu0 0.0
      %1528 = vmatpush1.msra.mxu0 %v930
      %1529 = vmatprep.subr.mxu0 0.0
      %1530 = vmatpush1.msra.mxu0 %v929
      %1531 = vmatprep.subr.mxu0 0.0
      %1532 = vmatpush1.msra.mxu0 %v928
      %1533 = vmatprep.subr.mxu0 0.0
      %1534 = vmatpush1.msra.mxu0 %v927
      %1535 = vmatprep.subr.mxu0 0.0
      %1536 = vmatpush1.msra.mxu0 %v926
      %1537 = vmatprep.subr.mxu0 0.0
      %1538 = vmatpush1.msra.mxu0 %v925
      %1539 = vmatprep.subr.mxu0 0.0
      %1540 = vmatpush1.msra.mxu0 %v924
      %1541 = vmatprep.subr.mxu0 0.0
      %1542 = vmatpush1.msra.mxu0 %v923
      %1543 = vmatprep.subr.mxu0 0.0
      %1544 = vmatpush1.msra.mxu0 %v922
      %1545 = vmatprep.subr.mxu0 0.0
      %1546 = vmatpush2.msra.mxu0 0.0
      %1547 = vmatprep.subr.mxu0 0.0
      %1548 = vmatpush2.msra.mxu0 0.0
      %1549 = vmatprep.subr.mxu0 0.0
      %1550 = vmatpush2.msra.mxu0 0.0
      %1551 = vmatprep.subr.mxu0 0.0
      %1552 = vmatpush2.msra.mxu0 0.0
      %1553 = vmatprep.subr.mxu0 0.0
      %1554 = vmatpush2.msra.mxu0 0.0
      %1555 = vmatprep.subr.mxu0 0.0
      %1556 = vmatpush2.msra.mxu0 0.0
      %1557 = vmatprep.subr.mxu0 0.0
      %1558 = vmatpush2.msra.mxu0 0.0
      %1559 = vmatprep.subr.mxu0 0.0
      %1560 = vmatpush2.msra.mxu0 0.0
      %1561 = vmatprep.subr.mxu0 0.0
      %1562 = vmatpush2.msra.mxu0 0.0
      %1563 = vmatprep.subr.mxu0 0.0
      %1564 = vmatpush2.msra.mxu0 0.0
      %1565 = vmatprep.subr.mxu0 0.0
      %1566 = vmatpush2.msra.mxu0 0.0
      %1567 = vmatprep.subr.mxu0 0.0
      %1568 = vmatpush2.msra.mxu0 0.0
      %1569 = vmatprep.subr.mxu0 0.0
      %1570 = vmatpush2.msra.mxu0 0.0
      %1571 = vmatprep.subr.mxu0 0.0
      %1572 = vmatpush2.msra.mxu0 0.0
      %1573 = vmatprep.subr.mxu0 0.0
      %1574 = vmatpush2.msra.mxu0 0.0
      %1575 = vmatprep.subr.mxu0 0.0
      %1576 = vmatpush2.msra.mxu0 0.0
      %1577 = vmatprep.mubr.f32.mxu0 0.0
      %1578 = vmatmul.mubr.f32.gmra.mxu0 %v1510
      %v1579 = vpop.f32.mrf.mxu0
      %v1580 = vadd.f32 0.0, %v1579
      %v1581 = vpop.f32.mrf.mxu0
      %1582 = vdwg.mxu0
      %v1583 = vadd.f32 %v1512, %v1580
      %v1584 = vtanh.pop %v1583
      %1585 = vst [vmem:[%s827] sm:$0xff] %v1584
      %v1586 = vld [vmem:[%s829] sm:$0xff]
      %1587 = vmatprep.subr.mxu0 0.0
      %1588 = vmatpush1.msra.mxu0 %v937
      %1589 = vmatprep.subr.mxu0 0.0
      %1590 = vmatpush1.msra.mxu0 %v936
      %1591 = vmatprep.subr.mxu0 0.0
      %1592 = vmatpush1.msra.mxu0 %v935
      %1593 = vmatprep.subr.mxu0 0.0
      %1594 = vmatpush1.msra.mxu0 %v934
      %1595 = vmatprep.subr.mxu0 0.0
      %1596 = vmatpush1.msra.mxu0 %v933
      %1597 = vmatprep.subr.mxu0 0.0
      %1598 = vmatpush1.msra.mxu0 %v932
      %1599 = vmatprep.subr.mxu0 0.0
      %1600 = vmatpush1.msra.mxu0 %v931
      %1601 = vmatprep.subr.mxu0 0.0
      %1602 = vmatpush1.msra.mxu0 %v930
      %1603 = vmatprep.subr.mxu0 0.0
      %1604 = vmatpush1.msra.mxu0 %v929
      %1605 = vmatprep.subr.mxu0 0.0
      %1606 = vmatpush1.msra.mxu0 %v928
      %1607 = vmatprep.subr.mxu0 0.0
      %1608 = vmatpush1.msra.mxu0 %v927
      %1609 = vmatprep.subr.mxu0 0.0
      %1610 = vmatpush1.msra.mxu0 %v926
      %1611 = vmatprep.subr.mxu0 0.0
      %1612 = vmatpush1.msra.mxu0 %v925
      %1613 = vmatprep.subr.mxu0 0.0
      %1614 = vmatpush1.msra.mxu0 %v924
      %1615 = vmatprep.subr.mxu0 0.0
      %1616 = vmatpush1.msra.mxu0 %v923
      %1617 = vmatprep.subr.mxu0 0.0
      %1618 = vmatpush1.msra.mxu0 %v922
      %1619 = vmatprep.subr.mxu0 0.0
      %1620 = vmatpush2.msra.mxu0 0.0
      %1621 = vmatprep.subr.mxu0 0.0
      %1622 = vmatpush2.msra.mxu0 0.0
      %1623 = vmatprep.subr.mxu0 0.0
      %1624 = vmatpush2.msra.mxu0 0.0
      %1625 = vmatprep.subr.mxu0 0.0
      %1626 = vmatpush2.msra.mxu0 0.0
      %1627 = vmatprep.subr.mxu0 0.0
      %1628 = vmatpush2.msra.mxu0 0.0
      %1629 = vmatprep.subr.mxu0 0.0
      %1630 = vmatpush2.msra.mxu0 0.0
      %1631 = vmatprep.subr.mxu0 0.0
      %1632 = vmatpush2.msra.mxu0 0.0
      %1633 = vmatprep.subr.mxu0 0.0
      %1634 = vmatpush2.msra.mxu0 0.0
      %1635 = vmatprep.subr.mxu0 0.0
      %1636 = vmatpush2.msra.mxu0 0.0
      %1637 = vmatprep.subr.mxu0 0.0
      %1638 = vmatpush2.msra.mxu0 0.0
      %1639 = vmatprep.subr.mxu0 0.0
      %1640 = vmatpush2.msra.mxu0 0.0
      %1641 = vmatprep.subr.mxu0 0.0
      %1642 = vmatpush2.msra.mxu0 0.0
      %1643 = vmatprep.subr.mxu0 0.0
      %1644 = vmatpush2.msra.mxu0 0.0
      %1645 = vmatprep.subr.mxu0 0.0
      %1646 = vmatpush2.msra.mxu0 0.0
      %1647 = vmatprep.subr.mxu0 0.0
      %1648 = vmatpush2.msra.mxu0 0.0
      %1649 = vmatprep.subr.mxu0 0.0
      %1650 = vmatpush2.msra.mxu0 0.0
      %1651 = vmatprep.mubr.f32.mxu0 0.0
      %1652 = vmatmul.mubr.f32.gmra.mxu0 %v1584
      %v1653 = vpop.f32.mrf.mxu0
      %v1654 = vadd.f32 0.0, %v1653
      %v1655 = vpop.f32.mrf.mxu0
      %1656 = vdwg.mxu0
      %v1657 = vadd.f32 %v1586, %v1654
      %v1658 = vtanh.pop %v1657
      %1659 = vst [vmem:[%s903] sm:$0xff] %v1658
      %s1660 = scalar_lea.vmem [#allocation17], 8
      %1661 = vst [vmem:[%s1660] sm:$0xff] %v1658
    $region73: #{tpu_custom_call.1} parent=1 // pred_fallthru
      _
    %v1662 = vld [vmem:[#allocation2] sm:$0xff]
    %v1663 = vld [vmem:[#allocation2 + $0x8] sm:$0xff]
    %v1664 = vld [vmem:[#allocation2 + $0x10] sm:$0xff]
    %v1665 = vld [vmem:[#allocation2 + $0x18] sm:$0xff]
    %v1666 = vld [vmem:[#allocation2 + $0x20] sm:$0xff]
    %v1667 = vld [vmem:[#allocation2 + $0x28] sm:$0xff]
    %v1668 = vld [vmem:[#allocation2 + $0x30] sm:$0xff]
    %v1669 = vld [vmem:[#allocation2 + $0x38] sm:$0xff]
    %v1670 = vld [vmem:[#allocation15] sm:$0xff]
    %v1671 = vld [vmem:[#allocation15 + $0x8] sm:$0xff]
    %v1672 = vld [vmem:[#allocation15 + $0x10] sm:$0xff]
    %v1673 = vld [vmem:[#allocation15 + $0x18] sm:$0xff]
    %v1674 = vld [vmem:[#allocation15 + $0x20] sm:$0xff]
    %v1675 = vld [vmem:[#allocation15 + $0x28] sm:$0xff]
    %v1676 = vld [vmem:[#allocation15 + $0x30] sm:$0xff]
    %v1677 = vld [vmem:[#allocation15 + $0x38] sm:$0xff]
    %v1678 = vld [vmem:[#allocation15 + $0x40] sm:$0xff]
    %v1679 = vld [vmem:[#allocation15 + $0x48] sm:$0xff]
    %v1680 = vld [vmem:[#allocation15 + $0x50] sm:$0xff]
    %v1681 = vld [vmem:[#allocation15 + $0x58] sm:$0xff]
    %v1682 = vld [vmem:[#allocation15 + $0x60] sm:$0xff]
    %v1683 = vld [vmem:[#allocation15 + $0x68] sm:$0xff]
    %v1684 = vld [vmem:[#allocation15 + $0x70] sm:$0xff]
    %v1685 = vld [vmem:[#allocation15 + $0x78] sm:$0xff]
    %v1686 = vld [vmem:[%s9] sm:$0x1]
    %v1688 = vlaneseq
    %v1689 = vshrl.u32 %v1688, 7
    %v1690 = vsub.s32 0, %v1689
    %v1691 = vrot.slane %v1686, %v1690
    %1693 = vmatprep.subr.mxu0 0.0
    %1694 = vmatpush1.msra.mxu0 %v1685
    %1695 = vmatprep.subr.mxu0 0.0
    %1696 = vmatpush1.msra.mxu0 %v1684
    %1697 = vmatprep.subr.mxu0 0.0
    %1698 = vmatpush1.msra.mxu0 %v1683
    %1699 = vmatprep.subr.mxu0 0.0
    %1700 = vmatpush1.msra.mxu0 %v1682
    %1701 = vmatprep.subr.mxu0 0.0
    %1702 = vmatpush1.msra.mxu0 %v1681
    %1703 = vmatprep.subr.mxu0 0.0
    %1704 = vmatpush1.msra.mxu0 %v1680
    %1705 = vmatprep.subr.mxu0 0.0
    %1706 = vmatpush1.msra.mxu0 %v1679
    %1707 = vmatprep.subr.mxu0 0.0
    %1708 = vmatpush1.msra.mxu0 %v1678
    %1709 = vmatprep.subr.mxu0 0.0
    %1710 = vmatpush1.msra.mxu0 %v1677
    %1711 = vmatprep.subr.mxu0 0.0
    %1712 = vmatpush1.msra.mxu0 %v1676
    %1713 = vmatprep.subr.mxu0 0.0
    %1714 = vmatpush1.msra.mxu0 %v1675
    %1715 = vmatprep.subr.mxu0 0.0
    %1716 = vmatpush1.msra.mxu0 %v1674
    %1717 = vmatprep.subr.mxu0 0.0
    %1718 = vmatpush1.msra.mxu0 %v1673
    %1719 = vmatprep.subr.mxu0 0.0
    %1720 = vmatpush1.msra.mxu0 %v1672
    %1721 = vmatprep.subr.mxu0 0.0
    %1722 = vmatpush1.msra.mxu0 %v1671
    %1723 = vmatprep.subr.mxu0 0.0
    %1724 = vmatpush1.msra.mxu0 %v1670
    %1725 = vmatprep.subr.mxu0 0.0
    %1726 = vmatpush2.msra.mxu0 0.0
    %1727 = vmatprep.subr.mxu0 0.0
    %1728 = vmatpush2.msra.mxu0 0.0
    %1729 = vmatprep.subr.mxu0 0.0
    %1730 = vmatpush2.msra.mxu0 0.0
    %1731 = vmatprep.subr.mxu0 0.0
    %1732 = vmatpush2.msra.mxu0 0.0
    %1733 = vmatprep.subr.mxu0 0.0
    %1734 = vmatpush2.msra.mxu0 0.0
    %1735 = vmatprep.subr.mxu0 0.0
    %1736 = vmatpush2.msra.mxu0 0.0
    %1737 = vmatprep.subr.mxu0 0.0
    %1738 = vmatpush2.msra.mxu0 0.0
    %1739 = vmatprep.subr.mxu0 0.0
    %1740 = vmatpush2.msra.mxu0 0.0
    %1741 = vmatprep.subr.mxu0 0.0
    %1742 = vmatpush2.msra.mxu0 0.0
    %1743 = vmatprep.subr.mxu0 0.0
    %1744 = vmatpush2.msra.mxu0 0.0
    %1745 = vmatprep.subr.mxu0 0.0
    %1746 = vmatpush2.msra.mxu0 0.0
    %1747 = vmatprep.subr.mxu0 0.0
    %1748 = vmatpush2.msra.mxu0 0.0
    %1749 = vmatprep.subr.mxu0 0.0
    %1750 = vmatpush2.msra.mxu0 0.0
    %1751 = vmatprep.subr.mxu0 0.0
    %1752 = vmatpush2.msra.mxu0 0.0
    %1753 = vmatprep.subr.mxu0 0.0
    %1754 = vmatpush2.msra.mxu0 0.0
    %1755 = vmatprep.subr.mxu0 0.0
    %1756 = vmatpush2.msra.mxu0 0.0
    %1757 = vmatprep.mubr.f32.mxu0 0.0
    %1758 = vmatmul.mubr.f32.gmra.mxu0 %v1662
    %v1759 = vpop.f32.mrf.mxu0
    %v1760 = vadd.f32 %v1691, %v1759
    %v1761 = vpop.f32.mrf.mxu0
    %1762 = vmatprep.mubr.f32.mxu0 0.0
    %1763 = vmatmul.mubr.f32.gmra.mxu0 %v1663
    %v1764 = vpop.f32.mrf.mxu0
    %v1765 = vadd.f32 %v1691, %v1764
    %v1766 = vpop.f32.mrf.mxu0
    %1767 = vmatprep.mubr.f32.mxu0 0.0
    %1768 = vmatmul.mubr.f32.gmra.mxu0 %v1664
    %v1769 = vpop.f32.mrf.mxu0
    %v1770 = vadd.f32 %v1691, %v1769
    %v1771 = vpop.f32.mrf.mxu0
    %1772 = vmatprep.mubr.f32.mxu0 0.0
    %1773 = vmatmul.mubr.f32.gmra.mxu0 %v1665
    %v1774 = vpop.f32.mrf.mxu0
    %v1775 = vadd.f32 %v1691, %v1774
    %v1776 = vpop.f32.mrf.mxu0
    %1777 = vmatprep.mubr.f32.mxu0 0.0
    %1778 = vmatmul.mubr.f32.gmra.mxu0 %v1666
    %v1779 = vpop.f32.mrf.mxu0
    %v1780 = vadd.f32 %v1691, %v1779
    %v1781 = vpop.f32.mrf.mxu0
    %1782 = vmatprep.mubr.f32.mxu0 0.0
    %1783 = vmatmul.mubr.f32.gmra.mxu0 %v1667
    %v1784 = vpop.f32.mrf.mxu0
    %v1785 = vadd.f32 %v1691, %v1784
    %v1786 = vpop.f32.mrf.mxu0
    %1787 = vmatprep.mubr.f32.mxu0 0.0
    %1788 = vmatmul.mubr.f32.gmra.mxu0 %v1668
    %v1789 = vpop.f32.mrf.mxu0
    %v1790 = vadd.f32 %v1691, %v1789
    %v1791 = vpop.f32.mrf.mxu0
    %1792 = vmatprep.mubr.f32.mxu0 0.0
    %1793 = vmatmul.mubr.f32.gmra.mxu0 %v1669
    %v1794 = vpop.f32.mrf.mxu0
    %v1795 = vadd.f32 %v1691, %v1794
    %v1796 = vpop.f32.mrf.mxu0
    %1797 = vdwg.mxu0
    %1798 = vst [vmem:[#allocation16] sm:$0xff] %v1760
    %1799 = vst [vmem:[#allocation16 + $0x8] sm:$0xff] %v1765
    %1800 = vst [vmem:[#allocation16 + $0x10] sm:$0xff] %v1770
    %1801 = vst [vmem:[#allocation16 + $0x18] sm:$0xff] %v1775
    %1802 = vst [vmem:[#allocation16 + $0x20] sm:$0xff] %v1780
    %1803 = vst [vmem:[#allocation16 + $0x28] sm:$0xff] %v1785
    %1804 = vst [vmem:[#allocation16 + $0x30] sm:$0xff] %v1790
    %1805 = vst [vmem:[#allocation16 + $0x38] sm:$0xff] %v1795
    // Predicated region
    $region74: #{tpu_custom_call.1} parent=1 // pred_check
      _
    $region75: #{tpu_custom_call.1} parent=1 // pred_check_branch
      %1807 = sbr.rel (0) target = $region77
    $region76: #{tpu_custom_call.1} parent=1 // pred_region
      %s1809 = ssub.s32 1024, 1024
      %1810 = vsyncadd [#allocation6], %s1809
      %s1811 = sshll.u32 [#allocation16], 4
      %s1812 = int_to_ptr.vmem [resolvable:$true] %s1811
      %1817 = dma.vmem_to_hbm [thread:$0]  %s1812, 1024, %s10, [#allocation6], 128, 128, 8
    $region77: #{tpu_custom_call.1} parent=1 // pred_fallthru
      _
    // Predicated region
    $region78: #{tpu_custom_call.1} parent=1 // pred_check
      _
    $region79: #{tpu_custom_call.1} parent=1 // pred_check_branch
      %1819 = sbr.rel (0) target = $region81
    $region80: #{tpu_custom_call.1} parent=1 // pred_region
      %s1821 = ssub.s32 256, 256
      %1822 = vsyncadd [#allocation18], %s1821
      %s1823 = sshll.u32 [#allocation17], 4
      %s1824 = int_to_ptr.vmem [resolvable:$true] %s1823
      %1829 = dma.vmem_to_hbm [thread:$0]  %s1824, 256, %s11, [#allocation18], 128, 128, 8
    $region81: #{tpu_custom_call.1} parent=1 // pred_fallthru
      _
    // Predicated region
    $region82: #{tpu_custom_call.1} parent=1 // pred_check
      _
    $region83: #{tpu_custom_call.1} parent=1 // pred_check_branch
      %1831 = sbr.rel (0) target = $region85
    $region84: #{tpu_custom_call.1} parent=1 // pred_region
      %1832 = dma.done [#allocation6], 1024
    $region85: #{tpu_custom_call.1} parent=1 // pred_fallthru
      _
    // Predicated region
    $region86: #{tpu_custom_call.1} parent=1 // pred_check
      _
    $region87: #{tpu_custom_call.1} parent=1 // pred_check_branch
      %1834 = sbr.rel (0) target = $region89
    $region88: #{tpu_custom_call.1} parent=1 // pred_region
      %1835 = dma.done [#allocation18], 256
    $region89: #{tpu_custom_call.1} parent=1 // pred_fallthru
      _
    %1836 = vsyncpa [#allocation5], 1
    %1837 = vsyncpa [#allocation8], 1
    %1838 = vsyncpa [#allocation11], 1
    %1839 = vsyncpa [#allocation14], 1
    %1840 = vsyncpa [#allocation6], 1
    %1841 = vsyncpa [#allocation18], 1

</llo_original>
